<compile_context>
chip_gen: v6e
topology: v6e:2x2x1
jax: 0.10.0
libtpu: 0.0.40
codegen_flags: <defaults>
</compile_context>

<pallas_src>
import numpy as np
import jax
import jax.numpy as jnp
from jax.experimental import pallas as pl
from jax.experimental.pallas import tpu as pltpu

# ---- "config" (mirrors the PyTorch module __init__) ----
HIDDEN_SIZE = 32
NUM_HEADS = 4
HEAD_DIM = HIDDEN_SIZE // NUM_HEADS            # attention_head_size = 8
IMG_SIZE = (16, 16)
PATCH = 4
N_PATCHES = (IMG_SIZE[0] // PATCH) * (IMG_SIZE[1] // PATCH)   # 16
N_TOKENS = N_PATCHES + 1                       # +1 CLS row/col of zero dists -> 17
SIGMA_HIDDEN = 64                              # sigma_layer_1: HEAD_DIM -> 64
SIGMA_OUT = 3                                  # sigma_layer_2: 64 -> 3
SIGMA_OUT_PAD = 8                              # pad the narrow head for the MXU / stores
LANE_PAD = 128                                 # lane-dense mask slab width
DIST_PAD = 1.0e6                               # padded-column squared distance -> exp -> 0
TEMPERATURE = float(np.float16(0.1))           # torch.tensor([t]).to(float16)
INV_TEMPERATURE = 1.0 / TEMPERATURE
F16_EPS = float(np.finfo(np.float16).eps)      # clamp_probs eps of the fp16 reference


def _erf(x):
    # Abramowitz & Stegun 7.1.26, |err| <= 1.5e-7 (keeps the exact-GELU semantics of F.gelu
    # and the 1e-4 sigma check; the tanh-GELU swap suggested as "optional" is skipped).
    a1, a2, a3 = 0.254829592, -0.284496736, 1.421413741
    a4, a5, p = -1.453152027, 1.061405429, 0.3275911
    sgn = jnp.where(x >= 0.0, 1.0, -1.0)
    ax = jnp.abs(x)
    t = 1.0 / (1.0 + p * ax)
    poly = ((((a5 * t + a4) * t + a3) * t + a2) * t + a1) * t
    return sgn * (1.0 - poly * jnp.exp(-ax * ax))


def _gelu_exact(x):
    return 0.5 * x * (1.0 + _erf(x * 0.7071067811865476))


def _gaussian_kernel_body(q_ref, w1_ref, b1_ref, w2_ref, b2_ref,
                          dr2_ref, drdc_ref, dc2_ref, u_ref, mask_ref, sig_ref):
    # --- sigma MLP over all B*H*N rows at once (single MXU pass per layer, f32) ---
    h = jnp.dot(q_ref[...], w1_ref[...], preferred_element_type=jnp.float32) + b1_ref[...]
    h = _gelu_exact(h)                                                      # (M, 64)
    s = jnp.dot(h, w2_ref[...], preferred_element_type=jnp.float32) + b2_ref[...]  # (M, 8)

    sx = jnp.maximum(s[:, 0:1], 0.0) + 1.0        # relu(sigmas[...,0]) + 1
    sy = jnp.maximum(s[:, 1:2], 0.0) + 1.0        # relu(sigmas[...,1]) + 1
    rho = 0.99 * jnp.tanh(s[:, 2:3])              # 0.99 * tanh(sigmas[...,2])

    s00 = sx * sx
    s11 = sy * sy
    s01 = rho * sx * sy

    # torch.linalg.inv of the 2x2 covariance -> closed form with ONE (M,1) divide.
    det = s00 * s11 - s01 * s01
    rdet = 1.0 / det
    inv_a = s11 * rdet
    inv_c = s00 * rdet
    inv_b2 = -2.0 * s01 * rdet                    # 2 * off-diagonal term

    # bf16 dist maps (exact small integers) upcast in-kernel; padded lanes carry DIST_PAD.
    dr2 = dr2_ref[...].astype(jnp.float32)
    drdc = drdc_ref[...].astype(jnp.float32)
    dc2 = dc2_ref[...].astype(jnp.float32)

    # weights[i,j] = -1/2 d^T Sigma_i^{-1} d  (<= 0, == 0 on diagonal / CLS lanes)
    w = -0.5 * (inv_a * dr2 + inv_b2 * drdc + inv_c * dc2)
    k = jnp.exp(w)                                # padded lanes: exp(-huge) == 0
    # probs = k / max_j k  is the identity (max == 1 analytically, also in the fp16 ref),
    # so the row reduce + reciprocal + multiply are deleted; clamp_probs(fp16 eps) only.
    pc = jnp.clip(k, F16_EPS, 1.0 - F16_EPS)

    # RelaxedBernoulli(temperature, probs).rsample() with wrapper-supplied uniform noise.
    u = jnp.clip(u_ref[...], F16_EPS, 1.0 - F16_EPS)
    # logit(pc) + logit(u) fused into a single log + divide per element.
    z = jnp.log((pc * u) / ((1.0 - pc) * (1.0 - u)))
    # sigmoid(z / T) via one EUP tanh; no clip needed (tanh saturates).
    mask_ref[...] = (0.5 + 0.5 * jnp.tanh((0.5 * INV_TEMPERATURE) * z)).astype(mask_ref.dtype)

    # sigma_matrix flattened row-major [s00, s01, s01, s11, 0, 0, 0, 0] via lane select
    # (8-lane store; wrapper slices [:, :4]).
    lane = jax.lax.broadcasted_iota(jnp.int32, (sig_ref.shape[0], SIGMA_OUT_PAD), 1)
    sig_ref[...] = jnp.where(lane == 0, s00,
                   jnp.where(lane == 3, s11,
                   jnp.where(lane < 3, s01, 0.0)))


def _gaussian_kernel_call(q2d, w1, b1, w2p, b2p, dr2t, drdct, dc2t, noise):
    M = q2d.shape[0]
    vmem = pl.BlockSpec(memory_space=pltpu.MemorySpace.VMEM)
    return pl.pallas_call(
        _gaussian_kernel_body,
        out_shape=(jax.ShapeDtypeStruct((M, LANE_PAD), jnp.float32),      # lane-dense mask slab
                   jax.ShapeDtypeStruct((M, SIGMA_OUT_PAD), jnp.float32)),  # [s00,s01,s01,s11,0..]
        in_specs=[vmem] * 9,
        out_specs=(vmem, vmem),
    )(q2d, w1, b1, w2p, b2p, dr2t, drdct, dc2t, noise)


@jax.jit
def gaussian_kernel_forward(query, w1, b1, w2p, b2p, dr2t, drdct, dc2t, noise):
    B, H, N, HD = query.shape
    q2d = query.reshape(B * H * N, HD)
    mask_pad, sig8 = _gaussian_kernel_call(q2d, w1, b1, w2p, b2p, dr2t, drdct, dc2t, noise)
    # Single layout op (needed anyway to drop lane padding) also does the ONE f32->f16 cast.
    mask = mask_pad[:, :N].reshape(B, H, N, N).astype(jnp.float16)
    sigma_matrix = sig8[:, :4].reshape(B, H, N, 2, 2)   # fp32, as in the reference
    return mask, sigma_matrix


def pairwise_dist_maps(n_patches):
    # Kernel.get_pairwise_distances: (n, n, 2) grid offsets, zero-padded for CLS.
    n = int(np.sqrt(n_patches))
    rows, cols = np.indices((n, n))
    idxs = np.stack([rows.flatten(), cols.flatten()], axis=-1).astype(np.float32)
    d = idxs[:, None, :] - idxs[None, :, :]
    d = np.pad(d, ((1, 0), (1, 0), (0, 0)))
    dr, dc = d[..., 0], d[..., 1]
    return dr * dr, dr * dc, dc * dc


def tiled_padded_dist_maps(n_patches, n_rep, lane_pad):
    # Tile (N,N) maps across the fused B*H axis, pad columns lane-dense, ship as bfloat16
    # (entries are small exact integers; DIST_PAD need not be exact).  Padded columns carry
    # a huge squared distance -> exp(weight) underflows to 0 (and are sliced off anyway).
    # TODO(synk): at larger B*H, deduplicate (single (N,128) copy + resident-block index_map
    # under a row grid) instead of replicating host-side.
    dr2, drdc, dc2 = pairwise_dist_maps(n_patches)
    out = []
    for m, pad_val in ((dr2, DIST_PAD), (drdc, 0.0), (dc2, DIST_PAD)):
        n = m.shape[0]
        mp = np.full((n, lane_pad), pad_val, np.float32)
        mp[:, :n] = m
        out.append(jnp.asarray(np.tile(mp, (n_rep, 1)), dtype=jnp.bfloat16))
    return tuple(out)


def reference_sigma_and_probs(query, w1, b1, w2, b2, dr2, drdc, dc2):
    # Pure-JAX reference for the deterministic part of the forward (f32 math).
    h = jax.nn.gelu(query @ w1 + b1[0], approximate=False)
    s = h @ w2 + b2[0]
    sx = jax.nn.relu(s[..., 0:1]) + 1.0
    sy = jax.nn.relu(s[..., 1:2]) + 1.0
    rho = 0.99 * jnp.tanh(s[..., 2:3])
    s00, s11, s01 = sx * sx, sy * sy, rho * sx * sy
    det = s00 * s11 - s01 * s01
    a, c, b_ = s11 / det, s00 / det, -s01 / det
    w = -0.5 * (a * dr2 + 2.0 * b_ * drdc + c * dc2)
    k = jnp.exp(w)
    probs = k / jnp.max(k, axis=-1, keepdims=True)
    row0 = jnp.concatenate([s00, s01], axis=-1)
    row1 = jnp.concatenate([s01, s11], axis=-1)
    sigma = jnp.stack([row0, row1], axis=-2)
    return probs, sigma


if __name__ == "__main__":
    B, H, N, HD = 2, NUM_HEADS, N_TOKENS, HEAD_DIM
    M = B * H * N

    key = jax.random.PRNGKey(0)
    k_w1, k_b1, k_w2, k_b2, k_q, k_u = jax.random.split(key, 6)

    # Deterministic parameter init (nn.Linear-style uniform bounds), stored as (in, out).
    lim1 = 1.0 / np.sqrt(HD)
    w1 = jax.random.uniform(k_w1, (HD, SIGMA_HIDDEN), jnp.float32, -lim1, lim1)
    b1 = jax.random.uniform(k_b1, (1, SIGMA_HIDDEN), jnp.float32, -lim1, lim1)
    lim2 = 1.0 / np.sqrt(SIGMA_HIDDEN)
    w2 = jax.random.uniform(k_w2, (SIGMA_HIDDEN, SIGMA_OUT), jnp.float32, -lim2, lim2)
    b2 = jax.random.uniform(k_b2, (1, SIGMA_OUT), jnp.float32, -lim2, lim2)

    # Zero-pad the narrow 3-wide head so the in-kernel dot has a friendlier shape.
    w2p = jnp.zeros((SIGMA_HIDDEN, SIGMA_OUT_PAD), jnp.float32).at[:, :SIGMA_OUT].set(w2)
    b2p = jnp.zeros((1, SIGMA_OUT_PAD), jnp.float32).at[:, :SIGMA_OUT].set(b2)

    query = jax.random.normal(k_q, (B, H, N, HD), jnp.float32)

    # RelaxedBernoulli uniform noise (the module samples internally; drawn here with a
    # fixed key so the run is deterministic).
    noise = jax.random.uniform(k_u, (M, LANE_PAD), jnp.float32)

    dr2t, drdct, dc2t = tiled_padded_dist_maps(N_PATCHES, B * H, LANE_PAD)

    mask, sigma_matrix = gaussian_kernel_forward(
        query, w1, b1, w2p, b2p, dr2t, drdct, dc2t, noise)
    jax.block_until_ready((mask, sigma_matrix))

    assert mask.shape == (B, H, N, N) and mask.dtype == jnp.float16
    assert sigma_matrix.shape == (B, H, N, 2, 2) and sigma_matrix.dtype == jnp.float32

    dr2, drdc, dc2 = (jnp.asarray(m) for m in pairwise_dist_maps(N_PATCHES))
    probs_ref, sigma_ref = reference_sigma_and_probs(query, w1, b1, w2, b2, dr2, drdc, dc2)

    # Deterministic path checked against the f32 reference.
    np.testing.assert_allclose(np.asarray(sigma_matrix), np.asarray(sigma_ref),
                               rtol=1e-4, atol=1e-4)

    # Mask is stochastic (RelaxedBernoulli), so it is validated structurally and
    # statistically against the deterministic probabilities.
    m = np.asarray(mask, np.float32)
    p = np.asarray(probs_ref, np.float32)
    assert np.all(np.isfinite(m))
    assert m.min() >= 0.0 and m.max() <= 1.0 + 1e-3
    hi = m[p > 0.9]
    lo = m[p < 0.1]
    assert hi.size > 0 and float(hi.mean()) > 0.6
    if lo.size > 0:
        assert float(lo.mean()) < 0.4

    print("KERNEL_OK")
</pallas_src>

<mosaic_0001>
module attributes {stable_mosaic.version = 11 : i64} {
  func.func @_gaussian_kernel_body(%arg0: memref<136x8xf32, #tpu.memory_space<vmem>>, %arg1: memref<8x64xf32, #tpu.memory_space<vmem>>, %arg2: memref<1x64xf32, #tpu.memory_space<vmem>>, %arg3: memref<64x8xf32, #tpu.memory_space<vmem>>, %arg4: memref<1x8xf32, #tpu.memory_space<vmem>>, %arg5: memref<136x128xbf16, #tpu.memory_space<vmem>>, %arg6: memref<136x128xbf16, #tpu.memory_space<vmem>>, %arg7: memref<136x128xbf16, #tpu.memory_space<vmem>>, %arg8: memref<136x128xf32, #tpu.memory_space<vmem>>, %arg9: memref<136x128xf32, #tpu.memory_space<vmem>>, %arg10: memref<136x8xf32, #tpu.memory_space<vmem>>) attributes {dimension_semantics = [], scalar_prefetch = 0 : i64, scratch_operands = 0 : i64, tpu.core_type = #tpu.core_type<tc>} {
    %c0 = arith.constant 0 : index
    %c0_0 = arith.constant 0 : index
    %0 = vector.load %arg0[%c0, %c0_0] : memref<136x8xf32, #tpu.memory_space<vmem>>, vector<136x8xf32>
    %c0_1 = arith.constant 0 : index
    %c0_2 = arith.constant 0 : index
    %1 = vector.load %arg1[%c0_1, %c0_2] : memref<8x64xf32, #tpu.memory_space<vmem>>, vector<8x64xf32>
    %cst = arith.constant dense<0.000000e+00> : vector<136x64xf32>
    %2 = tpu.matmul %0, %1, %cst {dimension_numbers = #tpu.dot_dimension_numbers<[1], [0], [0], [1], [0, 0, 1, 1], [], []>} : vector<136x8xf32>, vector<8x64xf32>, vector<136x64xf32> -> vector<136x64xf32>
    %c0_3 = arith.constant 0 : index
    %c0_4 = arith.constant 0 : index
    %3 = vector.load %arg2[%c0_3, %c0_4] : memref<1x64xf32, #tpu.memory_space<vmem>>, vector<1x64xf32>
    %4 = vector.broadcast %3 : vector<1x64xf32> to vector<136x64xf32>
    %5 = arith.addf %2, %4 : vector<136x64xf32>
    %cst_5 = arith.constant 5.000000e-01 : f32
    %6 = vector.broadcast %cst_5 : f32 to vector<136x64xf32>
    %7 = arith.mulf %6, %5 : vector<136x64xf32>
    %cst_6 = arith.constant 0.707106769 : f32
    %8 = vector.broadcast %cst_6 : f32 to vector<136x64xf32>
    %9 = arith.mulf %5, %8 : vector<136x64xf32>
    %cst_7 = arith.constant 0.000000e+00 : f32
    %10 = vector.broadcast %cst_7 : f32 to vector<136x64xf32>
    %11 = arith.cmpf oge, %9, %10 : vector<136x64xf32>
    %cst_8 = arith.constant 1.000000e+00 : f32
    %cst_9 = arith.constant -1.000000e+00 : f32
    %12 = vector.broadcast %cst_8 : f32 to vector<136x64xf32>
    %13 = vector.broadcast %cst_9 : f32 to vector<136x64xf32>
    %14 = arith.select %11, %12, %13 : vector<136x64xi1>, vector<136x64xf32>
    %15 = math.absf %9 : vector<136x64xf32>
    %cst_10 = arith.constant 0.327591091 : f32
    %16 = vector.broadcast %cst_10 : f32 to vector<136x64xf32>
    %17 = arith.mulf %16, %15 : vector<136x64xf32>
    %cst_11 = arith.constant 1.000000e+00 : f32
    %18 = vector.broadcast %cst_11 : f32 to vector<136x64xf32>
    %19 = arith.addf %18, %17 : vector<136x64xf32>
    %cst_12 = arith.constant 1.000000e+00 : f32
    %20 = vector.broadcast %cst_12 : f32 to vector<136x64xf32>
    %21 = arith.divf %20, %19 : vector<136x64xf32>
    %cst_13 = arith.constant 1.06140542 : f32
    %22 = vector.broadcast %cst_13 : f32 to vector<136x64xf32>
    %23 = arith.mulf %22, %21 : vector<136x64xf32>
    %cst_14 = arith.constant -1.45315206 : f32
    %24 = vector.broadcast %cst_14 : f32 to vector<136x64xf32>
    %25 = arith.addf %23, %24 : vector<136x64xf32>
    %26 = arith.mulf %25, %21 : vector<136x64xf32>
    %cst_15 = arith.constant 1.42141378 : f32
    %27 = vector.broadcast %cst_15 : f32 to vector<136x64xf32>
    %28 = arith.addf %26, %27 : vector<136x64xf32>
    %29 = arith.mulf %28, %21 : vector<136x64xf32>
    %cst_16 = arith.constant -0.284496725 : f32
    %30 = vector.broadcast %cst_16 : f32 to vector<136x64xf32>
    %31 = arith.addf %29, %30 : vector<136x64xf32>
    %32 = arith.mulf %31, %21 : vector<136x64xf32>
    %cst_17 = arith.constant 0.254829586 : f32
    %33 = vector.broadcast %cst_17 : f32 to vector<136x64xf32>
    %34 = arith.addf %32, %33 : vector<136x64xf32>
    %35 = arith.mulf %34, %21 : vector<136x64xf32>
    %cst_18 = arith.constant 0.000000e+00 : f32
    %36 = vector.broadcast %cst_18 : f32 to vector<136x64xf32>
    %37 = arith.subf %36, %15 : vector<136x64xf32>
    %38 = arith.mulf %37, %15 : vector<136x64xf32>
    %39 = math.exp %38 : vector<136x64xf32>
    %40 = arith.mulf %35, %39 : vector<136x64xf32>
    %cst_19 = arith.constant 1.000000e+00 : f32
    %41 = vector.broadcast %cst_19 : f32 to vector<136x64xf32>
    %42 = arith.subf %41, %40 : vector<136x64xf32>
    %43 = arith.mulf %14, %42 : vector<136x64xf32>
    %cst_20 = arith.constant 1.000000e+00 : f32
    %44 = vector.broadcast %cst_20 : f32 to vector<136x64xf32>
    %45 = arith.addf %44, %43 : vector<136x64xf32>
    %46 = arith.mulf %7, %45 : vector<136x64xf32>
    %c0_21 = arith.constant 0 : index
    %c0_22 = arith.constant 0 : index
    %47 = vector.load %arg3[%c0_21, %c0_22] : memref<64x8xf32, #tpu.memory_space<vmem>>, vector<64x8xf32>
    %cst_23 = arith.constant dense<0.000000e+00> : vector<136x8xf32>
    %48 = tpu.matmul %46, %47, %cst_23 {dimension_numbers = #tpu.dot_dimension_numbers<[1], [0], [0], [1], [0, 0, 1, 1], [], []>} : vector<136x64xf32>, vector<64x8xf32>, vector<136x8xf32> -> vector<136x8xf32>
    %c0_24 = arith.constant 0 : index
    %c0_25 = arith.constant 0 : index
    %49 = vector.load %arg4[%c0_24, %c0_25] : memref<1x8xf32, #tpu.memory_space<vmem>>, vector<1x8xf32>
    %50 = vector.broadcast %49 : vector<1x8xf32> to vector<136x8xf32>
    %51 = arith.addf %48, %50 : vector<136x8xf32>
    %52 = vector.extract_strided_slice %51 {offsets = [0, 0], sizes = [136, 1], strides = [1, 1]} : vector<136x8xf32> to vector<136x1xf32>
    %cst_26 = arith.constant 0.000000e+00 : f32
    %53 = vector.broadcast %cst_26 : f32 to vector<136x1xf32>
    %54 = arith.maximumf %52, %53 : vector<136x1xf32>
    %cst_27 = arith.constant 1.000000e+00 : f32
    %55 = vector.broadcast %cst_27 : f32 to vector<136x1xf32>
    %56 = arith.addf %54, %55 : vector<136x1xf32>
    %57 = vector.extract_strided_slice %51 {offsets = [0, 1], sizes = [136, 1], strides = [1, 1]} : vector<136x8xf32> to vector<136x1xf32>
    %cst_28 = arith.constant 0.000000e+00 : f32
    %58 = vector.broadcast %cst_28 : f32 to vector<136x1xf32>
    %59 = arith.maximumf %57, %58 : vector<136x1xf32>
    %cst_29 = arith.constant 1.000000e+00 : f32
    %60 = vector.broadcast %cst_29 : f32 to vector<136x1xf32>
    %61 = arith.addf %59, %60 : vector<136x1xf32>
    %62 = vector.extract_strided_slice %51 {offsets = [0, 2], sizes = [136, 1], strides = [1, 1]} : vector<136x8xf32> to vector<136x1xf32>
    %63 = math.tanh %62 : vector<136x1xf32>
    %cst_30 = arith.constant 9.900000e-01 : f32
    %64 = vector.broadcast %cst_30 : f32 to vector<136x1xf32>
    %65 = arith.mulf %64, %63 : vector<136x1xf32>
    %66 = arith.mulf %56, %56 : vector<136x1xf32>
    %67 = arith.mulf %61, %61 : vector<136x1xf32>
    %68 = arith.mulf %65, %56 : vector<136x1xf32>
    %69 = arith.mulf %68, %61 : vector<136x1xf32>
    %70 = arith.mulf %66, %67 : vector<136x1xf32>
    %71 = arith.mulf %69, %69 : vector<136x1xf32>
    %72 = arith.subf %70, %71 : vector<136x1xf32>
    %cst_31 = arith.constant 1.000000e+00 : f32
    %73 = vector.broadcast %cst_31 : f32 to vector<136x1xf32>
    %74 = arith.divf %73, %72 : vector<136x1xf32>
    %75 = arith.mulf %67, %74 : vector<136x1xf32>
    %76 = arith.mulf %66, %74 : vector<136x1xf32>
    %cst_32 = arith.constant -2.000000e+00 : f32
    %77 = vector.broadcast %cst_32 : f32 to vector<136x1xf32>
    %78 = arith.mulf %77, %69 : vector<136x1xf32>
    %79 = arith.mulf %78, %74 : vector<136x1xf32>
    %c0_33 = arith.constant 0 : index
    %c0_34 = arith.constant 0 : index
    %80 = vector.load %arg5[%c0_33, %c0_34] : memref<136x128xbf16, #tpu.memory_space<vmem>>, vector<136x128xbf16>
    %81 = arith.extf %80 : vector<136x128xbf16> to vector<136x128xf32>
    %c0_35 = arith.constant 0 : index
    %c0_36 = arith.constant 0 : index
    %82 = vector.load %arg6[%c0_35, %c0_36] : memref<136x128xbf16, #tpu.memory_space<vmem>>, vector<136x128xbf16>
    %83 = arith.extf %82 : vector<136x128xbf16> to vector<136x128xf32>
    %c0_37 = arith.constant 0 : index
    %c0_38 = arith.constant 0 : index
    %84 = vector.load %arg7[%c0_37, %c0_38] : memref<136x128xbf16, #tpu.memory_space<vmem>>, vector<136x128xbf16>
    %85 = arith.extf %84 : vector<136x128xbf16> to vector<136x128xf32>
    %86 = vector.broadcast %75 : vector<136x1xf32> to vector<136x128xf32>
    %87 = arith.mulf %86, %81 : vector<136x128xf32>
    %88 = vector.broadcast %79 : vector<136x1xf32> to vector<136x128xf32>
    %89 = arith.mulf %88, %83 : vector<136x128xf32>
    %90 = arith.addf %87, %89 : vector<136x128xf32>
    %91 = vector.broadcast %76 : vector<136x1xf32> to vector<136x128xf32>
    %92 = arith.mulf %91, %85 : vector<136x128xf32>
    %93 = arith.addf %90, %92 : vector<136x128xf32>
    %cst_39 = arith.constant -5.000000e-01 : f32
    %94 = vector.broadcast %cst_39 : f32 to vector<136x128xf32>
    %95 = arith.mulf %94, %93 : vector<136x128xf32>
    %96 = math.exp %95 : vector<136x128xf32>
    %cst_40 = arith.constant 9.765625E-4 : f32
    %cst_41 = arith.constant 0.999023437 : f32
    %97 = vector.broadcast %cst_40 : f32 to vector<136x128xf32>
    %98 = arith.maximumf %97, %96 : vector<136x128xf32>
    %99 = vector.broadcast %cst_41 : f32 to vector<136x128xf32>
    %100 = arith.minimumf %99, %98 : vector<136x128xf32>
    %c0_42 = arith.constant 0 : index
    %c0_43 = arith.constant 0 : index
    %101 = vector.load %arg8[%c0_42, %c0_43] : memref<136x128xf32, #tpu.memory_space<vmem>>, vector<136x128xf32>
    %cst_44 = arith.constant 9.765625E-4 : f32
    %cst_45 = arith.constant 0.999023437 : f32
    %102 = vector.broadcast %cst_44 : f32 to vector<136x128xf32>
    %103 = arith.maximumf %102, %101 : vector<136x128xf32>
    %104 = vector.broadcast %cst_45 : f32 to vector<136x128xf32>
    %105 = arith.minimumf %104, %103 : vector<136x128xf32>
    %106 = arith.mulf %100, %105 : vector<136x128xf32>
    %cst_46 = arith.constant 1.000000e+00 : f32
    %107 = vector.broadcast %cst_46 : f32 to vector<136x128xf32>
    %108 = arith.subf %107, %100 : vector<136x128xf32>
    %cst_47 = arith.constant 1.000000e+00 : f32
    %109 = vector.broadcast %cst_47 : f32 to vector<136x128xf32>
    %110 = arith.subf %109, %105 : vector<136x128xf32>
    %111 = arith.mulf %108, %110 : vector<136x128xf32>
    %112 = arith.divf %106, %111 : vector<136x128xf32>
    %113 = math.log %112 : vector<136x128xf32>
    %cst_48 = arith.constant 5.00122118 : f32
    %114 = vector.broadcast %cst_48 : f32 to vector<136x128xf32>
    %115 = arith.mulf %114, %113 : vector<136x128xf32>
    %116 = math.tanh %115 : vector<136x128xf32>
    %cst_49 = arith.constant 5.000000e-01 : f32
    %117 = vector.broadcast %cst_49 : f32 to vector<136x128xf32>
    %118 = arith.mulf %117, %116 : vector<136x128xf32>
    %cst_50 = arith.constant 5.000000e-01 : f32
    %119 = vector.broadcast %cst_50 : f32 to vector<136x128xf32>
    %120 = arith.addf %119, %118 : vector<136x128xf32>
    %c0_51 = arith.constant 0 : index
    %c0_52 = arith.constant 0 : index
    %121 = vector.load %arg9[%c0_51, %c0_52] : memref<136x128xf32, #tpu.memory_space<vmem>>, vector<136x128xf32>
    tpu.vector_store %arg9[%c0_51, %c0_52], %120 {strides = array<i32>} : memref<136x128xf32, #tpu.memory_space<vmem>>, vector<136x128xf32>,
    %122 = tpu.iota {dimensions = array<i32: 1>} : vector<136x8xi32>
    %c0_i32 = arith.constant 0 : i32
    %123 = vector.broadcast %c0_i32 : i32 to vector<136x8xi32>
    %124 = arith.cmpi eq, %122, %123 : vector<136x8xi32>
    %c3_i32 = arith.constant 3 : i32
    %125 = vector.broadcast %c3_i32 : i32 to vector<136x8xi32>
    %126 = arith.cmpi eq, %122, %125 : vector<136x8xi32>
    %c3_i32_53 = arith.constant 3 : i32
    %127 = vector.broadcast %c3_i32_53 : i32 to vector<136x8xi32>
    %128 = arith.cmpi slt, %122, %127 : vector<136x8xi32>
    %cst_54 = arith.constant 0.000000e+00 : f32
    %129 = vector.shape_cast %69 : vector<136x1xf32> to vector<136x1xf32>
    %130 = vector.broadcast %129 : vector<136x1xf32> to vector<136x8xf32>
    %131 = vector.broadcast %cst_54 : f32 to vector<136x8xf32>
    %132 = arith.select %128, %130, %131 : vector<136x8xi1>, vector<136x8xf32>
    %133 = vector.shape_cast %67 : vector<136x1xf32> to vector<136x1xf32>
    %134 = vector.broadcast %133 : vector<136x1xf32> to vector<136x8xf32>
    %135 = arith.select %126, %134, %132 : vector<136x8xi1>, vector<136x8xf32>
    %136 = vector.shape_cast %66 : vector<136x1xf32> to vector<136x1xf32>
    %137 = vector.broadcast %136 : vector<136x1xf32> to vector<136x8xf32>
    %138 = arith.select %124, %137, %135 : vector<136x8xi1>, vector<136x8xf32>
    %c0_55 = arith.constant 0 : index
    %c0_56 = arith.constant 0 : index
    %139 = vector.load %arg10[%c0_55, %c0_56] : memref<136x8xf32, #tpu.memory_space<vmem>>, vector<136x8xf32>
    tpu.vector_store %arg10[%c0_55, %c0_56], %138 {strides = array<i32>} : memref<136x8xf32, #tpu.memory_space<vmem>>, vector<136x8xf32>,
    return
  }
}

</mosaic_0001>

<llo_original>
// kernel: gaussian_kernel_forward.1
$region0: #{gaussian_kernel_forward.1}
  #allocation0 [shape = 'u32[]', space=smem, size = 0x4, offset = 0x4, fixed_abs, tag = 'smem constant byte address 0x4 - core index']
  #allocation1 [shape = 'u32[144,128]{1,0:T(1,128)}', space=vmem, size = 0x12000, scoped, tag = 'internal scratch']
  %s0 = inlined_call_operand.vmem [shape: f32[136,8], index: 0, kind: input, shape index: {}]
  %s1 = inlined_call_operand.vmem [shape: f32[8,64], index: 1, kind: input, shape index: {}]
  %s2 = inlined_call_operand.vmem [shape: f32[1,64], index: 2, kind: input, shape index: {}]
  %s3 = inlined_call_operand.vmem [shape: f32[64,8], index: 3, kind: input, shape index: {}]
  %s4 = inlined_call_operand.vmem [shape: f32[1,8], index: 4, kind: input, shape index: {}]
  %s5 = inlined_call_operand.vmem [shape: bf16[136,128], index: 5, kind: input, shape index: {}]
  %s6 = inlined_call_operand.vmem [shape: bf16[136,128], index: 6, kind: input, shape index: {}]
  %s7 = inlined_call_operand.vmem [shape: bf16[136,128], index: 7, kind: input, shape index: {}]
  %s8 = inlined_call_operand.vmem [shape: f32[136,128], index: 8, kind: input, shape index: {}]
  %s9 = inlined_call_operand.vmem [shape: f32[136,128], index: 9, kind: output, shape index: {0}]
  %s10 = inlined_call_operand.vmem [shape: f32[136,8], index: 10, kind: output, shape index: {1}]
  %11 = xla_tuple %s9, %s10
  %s12 = sld [smem:[#allocation0]]
  $region54: #{gaussian_kernel_forward.1} parent=0
    _
  %s14 = ssub.s32 1, %s12
  %s15 = scalar_select 0, %s14, %s12
  // Predicated region
  $region2: #{gaussian_kernel_forward.1} parent=0 // pred_check
    _
  $region3: #{gaussian_kernel_forward.1} parent=0 // pred_check_branch
    %17 = sbr.rel (0) target = $region5
  $region4: #{gaussian_kernel_forward.1} parent=0 // pred_region
    _
  $region5: #{gaussian_kernel_forward.1} parent=0 // pred_fallthru
    _
  // Predicated region
  $region6: #{gaussian_kernel_forward.1} parent=0 // pred_check
    _
  $region7: #{gaussian_kernel_forward.1} parent=0 // pred_check_branch
    %19 = sbr.rel (0) target = $region9
  $region8: #{gaussian_kernel_forward.1} parent=0 // pred_region
    _
  $region9: #{gaussian_kernel_forward.1} parent=0 // pred_fallthru
    _
  // Predicated region
  $region10: #{gaussian_kernel_forward.1} parent=0 // pred_check
    _
  $region11: #{gaussian_kernel_forward.1} parent=0 // pred_check_branch
    %21 = sbr.rel (0) target = $region13
  $region12: #{gaussian_kernel_forward.1} parent=0 // pred_region
    _
  $region13: #{gaussian_kernel_forward.1} parent=0 // pred_fallthru
    _
  // Predicated region
  $region14: #{gaussian_kernel_forward.1} parent=0 // pred_check
    _
  $region15: #{gaussian_kernel_forward.1} parent=0 // pred_check_branch
    %23 = sbr.rel (0) target = $region17
  $region16: #{gaussian_kernel_forward.1} parent=0 // pred_region
    _
  $region17: #{gaussian_kernel_forward.1} parent=0 // pred_fallthru
    _
  // Predicated region
  $region18: #{gaussian_kernel_forward.1} parent=0 // pred_check
    _
  $region19: #{gaussian_kernel_forward.1} parent=0 // pred_check_branch
    %25 = sbr.rel (0) target = $region21
  $region20: #{gaussian_kernel_forward.1} parent=0 // pred_region
    _
  $region21: #{gaussian_kernel_forward.1} parent=0 // pred_fallthru
    _
  // Predicated region
  $region22: #{gaussian_kernel_forward.1} parent=0 // pred_check
    _
  $region23: #{gaussian_kernel_forward.1} parent=0 // pred_check_branch
    %27 = sbr.rel (0) target = $region25
  $region24: #{gaussian_kernel_forward.1} parent=0 // pred_region
    _
  $region25: #{gaussian_kernel_forward.1} parent=0 // pred_fallthru
    _
  // Predicated region
  $region26: #{gaussian_kernel_forward.1} parent=0 // pred_check
    _
  $region27: #{gaussian_kernel_forward.1} parent=0 // pred_check_branch
    %29 = sbr.rel (0) target = $region29
  $region28: #{gaussian_kernel_forward.1} parent=0 // pred_region
    _
  $region29: #{gaussian_kernel_forward.1} parent=0 // pred_fallthru
    _
  // Predicated region
  $region30: #{gaussian_kernel_forward.1} parent=0 // pred_check
    _
  $region31: #{gaussian_kernel_forward.1} parent=0 // pred_check_branch
    %31 = sbr.rel (0) target = $region33
  $region32: #{gaussian_kernel_forward.1} parent=0 // pred_region
    _
  $region33: #{gaussian_kernel_forward.1} parent=0 // pred_fallthru
    _
  // Predicated region
  $region34: #{gaussian_kernel_forward.1} parent=0 // pred_check
    _
  $region35: #{gaussian_kernel_forward.1} parent=0 // pred_check_branch
    %33 = sbr.rel (0) target = $region37
  $region36: #{gaussian_kernel_forward.1} parent=0 // pred_region
    _
  $region37: #{gaussian_kernel_forward.1} parent=0 // pred_fallthru
    _
  %v34 = vld [vmem:[%s0] sm:$0xff]
  %v35 = vld [vmem:[%s0 + $0x8] sm:$0xff]
  %v36 = vld [vmem:[%s0 + $0x10] sm:$0xff]
  %v37 = vld [vmem:[%s0 + $0x18] sm:$0xff]
  %v38 = vld [vmem:[%s0 + $0x20] sm:$0xff]
  %v39 = vld [vmem:[%s0 + $0x28] sm:$0xff]
  %v40 = vld [vmem:[%s0 + $0x30] sm:$0xff]
  %v41 = vld [vmem:[%s0 + $0x38] sm:$0xff]
  %v42 = vld [vmem:[%s0 + $0x40] sm:$0xff]
  %v43 = vld [vmem:[%s0 + $0x48] sm:$0xff]
  %v44 = vld [vmem:[%s0 + $0x50] sm:$0xff]
  %v45 = vld [vmem:[%s0 + $0x58] sm:$0xff]
  %v46 = vld [vmem:[%s0 + $0x60] sm:$0xff]
  %v47 = vld [vmem:[%s0 + $0x68] sm:$0xff]
  %v48 = vld [vmem:[%s0 + $0x70] sm:$0xff]
  %v49 = vld [vmem:[%s0 + $0x78] sm:$0xff]
  %v50 = vld [vmem:[%s0 + $0x80] sm:$0xff]
  %v51 = vld [vmem:[%s1] sm:$0xff]
  %v52 = vld [vmem:[%s2] sm:$0x1]
  %v54 = vlaneseq
  %v55 = vshrl.u32 %v54, 7
  %v56 = vsub.s32 0, %v55
  %v57 = vrot.slane %v52, %v56
  %vm59 = vcmask 64512
  %v61 = vsel %vm59, %v34, 0
  %v64 = vsel %vm59, %v35, 0
  %v67 = vsel %vm59, %v36, 0
  %v70 = vsel %vm59, %v37, 0
  %v73 = vsel %vm59, %v38, 0
  %v76 = vsel %vm59, %v39, 0
  %v79 = vsel %vm59, %v40, 0
  %v82 = vsel %vm59, %v41, 0
  %v85 = vsel %vm59, %v42, 0
  %v88 = vsel %vm59, %v43, 0
  %v91 = vsel %vm59, %v44, 0
  %v94 = vsel %vm59, %v45, 0
  %v97 = vsel %vm59, %v46, 0
  %v100 = vsel %vm59, %v47, 0
  %v103 = vsel %vm59, %v48, 0
  %v106 = vsel %vm59, %v49, 0
  %v109 = vsel %vm59, %v50, 0
  %111 = vmatprep.subr.mxu0 0.0
  %112 = vmatpush1.msra.mxu0 0.0
  %113 = vmatprep.subr.mxu0 0.0
  %114 = vmatpush1.msra.mxu0 0.0
  %115 = vmatprep.subr.mxu0 0.0
  %116 = vmatpush1.msra.mxu0 0.0
  %117 = vmatprep.subr.mxu0 0.0
  %118 = vmatpush1.msra.mxu0 0.0
  %119 = vmatprep.subr.mxu0 0.0
  %120 = vmatpush1.msra.mxu0 0.0
  %121 = vmatprep.subr.mxu0 0.0
  %122 = vmatpush1.msra.mxu0 0.0
  %123 = vmatprep.subr.mxu0 0.0
  %124 = vmatpush1.msra.mxu0 0.0
  %125 = vmatprep.subr.mxu0 0.0
  %126 = vmatpush1.msra.mxu0 0.0
  %127 = vmatprep.subr.mxu0 0.0
  %128 = vmatpush1.msra.mxu0 0.0
  %129 = vmatprep.subr.mxu0 0.0
  %130 = vmatpush1.msra.mxu0 0.0
  %131 = vmatprep.subr.mxu0 0.0
  %132 = vmatpush1.msra.mxu0 0.0
  %133 = vmatprep.subr.mxu0 0.0
  %134 = vmatpush1.msra.mxu0 0.0
  %135 = vmatprep.subr.mxu0 0.0
  %136 = vmatpush1.msra.mxu0 0.0
  %137 = vmatprep.subr.mxu0 0.0
  %138 = vmatpush1.msra.mxu0 0.0
  %139 = vmatprep.subr.mxu0 0.0
  %140 = vmatpush1.msra.mxu0 0.0
  %141 = vmatprep.subr.mxu0 0.0
  %142 = vmatpush1.msra.mxu0 %v51
  %143 = vmatprep.subr.mxu0 0.0
  %144 = vmatpush2.msra.mxu0 0.0
  %145 = vmatprep.subr.mxu0 0.0
  %146 = vmatpush2.msra.mxu0 0.0
  %147 = vmatprep.subr.mxu0 0.0
  %148 = vmatpush2.msra.mxu0 0.0
  %149 = vmatprep.subr.mxu0 0.0
  %150 = vmatpush2.msra.mxu0 0.0
  %151 = vmatprep.subr.mxu0 0.0
  %152 = vmatpush2.msra.mxu0 0.0
  %153 = vmatprep.subr.mxu0 0.0
  %154 = vmatpush2.msra.mxu0 0.0
  %155 = vmatprep.subr.mxu0 0.0
  %156 = vmatpush2.msra.mxu0 0.0
  %157 = vmatprep.subr.mxu0 0.0
  %158 = vmatpush2.msra.mxu0 0.0
  %159 = vmatprep.subr.mxu0 0.0
  %160 = vmatpush2.msra.mxu0 0.0
  %161 = vmatprep.subr.mxu0 0.0
  %162 = vmatpush2.msra.mxu0 0.0
  %163 = vmatprep.subr.mxu0 0.0
  %164 = vmatpush2.msra.mxu0 0.0
  %165 = vmatprep.subr.mxu0 0.0
  %166 = vmatpush2.msra.mxu0 0.0
  %167 = vmatprep.subr.mxu0 0.0
  %168 = vmatpush2.msra.mxu0 0.0
  %169 = vmatprep.subr.mxu0 0.0
  %170 = vmatpush2.msra.mxu0 0.0
  %171 = vmatprep.subr.mxu0 0.0
  %172 = vmatpush2.msra.mxu0 0.0
  %173 = vmatprep.subr.mxu0 0.0
  %174 = vmatpush2.msra.mxu0 0.0
  %175 = vmatprep.mubr.f32.mxu0 0.0
  %176 = vmatmul.mubr.f32.gmra.mxu0 %v61
  %v177 = vpop.f32.mrf.mxu0
  %v178 = vadd.f32 %v57, %v177
  %v179 = vpop.f32.mrf.mxu0
  %180 = vmatprep.mubr.f32.mxu0 0.0
  %181 = vmatmul.mubr.f32.gmra.mxu0 %v64
  %v182 = vpop.f32.mrf.mxu0
  %v183 = vadd.f32 %v57, %v182
  %v184 = vpop.f32.mrf.mxu0
  %185 = vmatprep.mubr.f32.mxu0 0.0
  %186 = vmatmul.mubr.f32.gmra.mxu0 %v67
  %v187 = vpop.f32.mrf.mxu0
  %v188 = vadd.f32 %v57, %v187
  %v189 = vpop.f32.mrf.mxu0
  %190 = vmatprep.mubr.f32.mxu0 0.0
  %191 = vmatmul.mubr.f32.gmra.mxu0 %v70
  %v192 = vpop.f32.mrf.mxu0
  %v193 = vadd.f32 %v57, %v192
  %v194 = vpop.f32.mrf.mxu0
  %195 = vmatprep.mubr.f32.mxu0 0.0
  %196 = vmatmul.mubr.f32.gmra.mxu0 %v73
  %v197 = vpop.f32.mrf.mxu0
  %v198 = vadd.f32 %v57, %v197
  %v199 = vpop.f32.mrf.mxu0
  %200 = vmatprep.mubr.f32.mxu0 0.0
  %201 = vmatmul.mubr.f32.gmra.mxu0 %v76
  %v202 = vpop.f32.mrf.mxu0
  %v203 = vadd.f32 %v57, %v202
  %v204 = vpop.f32.mrf.mxu0
  %205 = vmatprep.mubr.f32.mxu0 0.0
  %206 = vmatmul.mubr.f32.gmra.mxu0 %v79
  %v207 = vpop.f32.mrf.mxu0
  %v208 = vadd.f32 %v57, %v207
  %v209 = vpop.f32.mrf.mxu0
  %210 = vmatprep.mubr.f32.mxu0 0.0
  %211 = vmatmul.mubr.f32.gmra.mxu0 %v82
  %v212 = vpop.f32.mrf.mxu0
  %v213 = vadd.f32 %v57, %v212
  %v214 = vpop.f32.mrf.mxu0
  %215 = vmatprep.mubr.f32.mxu0 0.0
  %216 = vmatmul.mubr.f32.gmra.mxu0 %v85
  %v217 = vpop.f32.mrf.mxu0
  %v218 = vadd.f32 %v57, %v217
  %v219 = vpop.f32.mrf.mxu0
  %220 = vmatprep.mubr.f32.mxu0 0.0
  %221 = vmatmul.mubr.f32.gmra.mxu0 %v88
  %v222 = vpop.f32.mrf.mxu0
  %v223 = vadd.f32 %v57, %v222
  %v224 = vpop.f32.mrf.mxu0
  %225 = vmatprep.mubr.f32.mxu0 0.0
  %226 = vmatmul.mubr.f32.gmra.mxu0 %v91
  %v227 = vpop.f32.mrf.mxu0
  %v228 = vadd.f32 %v57, %v227
  %v229 = vpop.f32.mrf.mxu0
  %230 = vmatprep.mubr.f32.mxu0 0.0
  %231 = vmatmul.mubr.f32.gmra.mxu0 %v94
  %v232 = vpop.f32.mrf.mxu0
  %v233 = vadd.f32 %v57, %v232
  %v234 = vpop.f32.mrf.mxu0
  %235 = vmatprep.mubr.f32.mxu0 0.0
  %236 = vmatmul.mubr.f32.gmra.mxu0 %v97
  %v237 = vpop.f32.mrf.mxu0
  %v238 = vadd.f32 %v57, %v237
  %v239 = vpop.f32.mrf.mxu0
  %240 = vmatprep.mubr.f32.mxu0 0.0
  %241 = vmatmul.mubr.f32.gmra.mxu0 %v100
  %v242 = vpop.f32.mrf.mxu0
  %v243 = vadd.f32 %v57, %v242
  %v244 = vpop.f32.mrf.mxu0
  %245 = vmatprep.mubr.f32.mxu0 0.0
  %246 = vmatmul.mubr.f32.gmra.mxu0 %v103
  %v247 = vpop.f32.mrf.mxu0
  %v248 = vadd.f32 %v57, %v247
  %v249 = vpop.f32.mrf.mxu0
  %250 = vmatprep.mubr.f32.mxu0 0.0
  %251 = vmatmul.mubr.f32.gmra.mxu0 %v106
  %v252 = vpop.f32.mrf.mxu0
  %v253 = vadd.f32 %v57, %v252
  %v254 = vpop.f32.mrf.mxu0
  %255 = vmatprep.mubr.f32.mxu0 0.0
  %256 = vmatmul.mubr.f32.gmra.mxu0 %v109
  %v257 = vpop.f32.mrf.mxu0
  %v258 = vadd.f32 %v57, %v257
  %v259 = vpop.f32.mrf.mxu0
  %260 = vdwg.mxu0
  %v261 = vmul.f32 %v178, 0.5
  %v262 = vmul.f32 %v183, 0.5
  %v263 = vmul.f32 %v188, 0.5
  %v264 = vmul.f32 %v193, 0.5
  %v265 = vmul.f32 %v198, 0.5
  %v266 = vmul.f32 %v203, 0.5
  %v267 = vmul.f32 %v208, 0.5
  %v268 = vmul.f32 %v213, 0.5
  %v269 = vmul.f32 %v218, 0.5
  %v270 = vmul.f32 %v223, 0.5
  %v271 = vmul.f32 %v228, 0.5
  %v272 = vmul.f32 %v233, 0.5
  %v273 = vmul.f32 %v238, 0.5
  %v274 = vmul.f32 %v243, 0.5
  %v275 = vmul.f32 %v248, 0.5
  %v276 = vmul.f32 %v253, 0.5
  %v277 = vmul.f32 %v258, 0.5
  %v278 = vmul.f32 %v178, 0.70710677
  %v279 = vmul.f32 %v183, 0.70710677
  %v280 = vmul.f32 %v188, 0.70710677
  %v281 = vmul.f32 %v193, 0.70710677
  %v282 = vmul.f32 %v198, 0.70710677
  %v283 = vmul.f32 %v203, 0.70710677
  %v284 = vmul.f32 %v208, 0.70710677
  %v285 = vmul.f32 %v213, 0.70710677
  %v286 = vmul.f32 %v218, 0.70710677
  %v287 = vmul.f32 %v223, 0.70710677
  %v288 = vmul.f32 %v228, 0.70710677
  %v289 = vmul.f32 %v233, 0.70710677
  %v290 = vmul.f32 %v238, 0.70710677
  %v291 = vmul.f32 %v243, 0.70710677
  %v292 = vmul.f32 %v248, 0.70710677
  %v293 = vmul.f32 %v253, 0.70710677
  %v294 = vmul.f32 %v258, 0.70710677
  %vm295 = vcmp.ge.f32.partialorder %v278, 0.0
  %vm296 = vcmp.ge.f32.partialorder %v279, 0.0
  %vm297 = vcmp.ge.f32.partialorder %v280, 0.0
  %vm298 = vcmp.ge.f32.partialorder %v281, 0.0
  %vm299 = vcmp.ge.f32.partialorder %v282, 0.0
  %vm300 = vcmp.ge.f32.partialorder %v283, 0.0
  %vm301 = vcmp.ge.f32.partialorder %v284, 0.0
  %vm302 = vcmp.ge.f32.partialorder %v285, 0.0
  %vm303 = vcmp.ge.f32.partialorder %v286, 0.0
  %vm304 = vcmp.ge.f32.partialorder %v287, 0.0
  %vm305 = vcmp.ge.f32.partialorder %v288, 0.0
  %vm306 = vcmp.ge.f32.partialorder %v289, 0.0
  %vm307 = vcmp.ge.f32.partialorder %v290, 0.0
  %vm308 = vcmp.ge.f32.partialorder %v291, 0.0
  %vm309 = vcmp.ge.f32.partialorder %v292, 0.0
  %vm310 = vcmp.ge.f32.partialorder %v293, 0.0
  %vm311 = vcmp.ge.f32.partialorder %v294, 0.0
  %v312 = vsel %vm295, 1.0, -1.0
  %v313 = vsel %vm296, 1.0, -1.0
  %v314 = vsel %vm297, 1.0, -1.0
  %v315 = vsel %vm298, 1.0, -1.0
  %v316 = vsel %vm299, 1.0, -1.0
  %v317 = vsel %vm300, 1.0, -1.0
  %v318 = vsel %vm301, 1.0, -1.0
  %v319 = vsel %vm302, 1.0, -1.0
  %v320 = vsel %vm303, 1.0, -1.0
  %v321 = vsel %vm304, 1.0, -1.0
  %v322 = vsel %vm305, 1.0, -1.0
  %v323 = vsel %vm306, 1.0, -1.0
  %v324 = vsel %vm307, 1.0, -1.0
  %v325 = vsel %vm308, 1.0, -1.0
  %v326 = vsel %vm309, 1.0, -1.0
  %v327 = vsel %vm310, 1.0, -1.0
  %v328 = vsel %vm311, 1.0, -1.0
  %v329 = vand.u32 2147483647, %v278
  %v330 = vand.u32 2147483647, %v279
  %v331 = vand.u32 2147483647, %v280
  %v332 = vand.u32 2147483647, %v281
  %v333 = vand.u32 2147483647, %v282
  %v334 = vand.u32 2147483647, %v283
  %v335 = vand.u32 2147483647, %v284
  %v336 = vand.u32 2147483647, %v285
  %v337 = vand.u32 2147483647, %v286
  %v338 = vand.u32 2147483647, %v287
  %v339 = vand.u32 2147483647, %v288
  %v340 = vand.u32 2147483647, %v289
  %v341 = vand.u32 2147483647, %v290
  %v342 = vand.u32 2147483647, %v291
  %v343 = vand.u32 2147483647, %v292
  %v344 = vand.u32 2147483647, %v293
  %v345 = vand.u32 2147483647, %v294
  %v346 = vmul.f32 %v329, 0.3275911
  %v347 = vmul.f32 %v330, 0.3275911
  %v348 = vmul.f32 %v331, 0.3275911
  %v349 = vmul.f32 %v332, 0.3275911
  %v350 = vmul.f32 %v333, 0.3275911
  %v351 = vmul.f32 %v334, 0.3275911
  %v352 = vmul.f32 %v335, 0.3275911
  %v353 = vmul.f32 %v336, 0.3275911
  %v354 = vmul.f32 %v337, 0.3275911
  %v355 = vmul.f32 %v338, 0.3275911
  %v356 = vmul.f32 %v339, 0.3275911
  %v357 = vmul.f32 %v340, 0.3275911
  %v358 = vmul.f32 %v341, 0.3275911
  %v359 = vmul.f32 %v342, 0.3275911
  %v360 = vmul.f32 %v343, 0.3275911
  %v361 = vmul.f32 %v344, 0.3275911
  %v362 = vmul.f32 %v345, 0.3275911
  %v363 = vadd.f32 %v346, 1.0
  %v364 = vadd.f32 %v347, 1.0
  %v365 = vadd.f32 %v348, 1.0
  %v366 = vadd.f32 %v349, 1.0
  %v367 = vadd.f32 %v350, 1.0
  %v368 = vadd.f32 %v351, 1.0
  %v369 = vadd.f32 %v352, 1.0
  %v370 = vadd.f32 %v353, 1.0
  %v371 = vadd.f32 %v354, 1.0
  %v372 = vadd.f32 %v355, 1.0
  %v373 = vadd.f32 %v356, 1.0
  %v374 = vadd.f32 %v357, 1.0
  %v375 = vadd.f32 %v358, 1.0
  %v376 = vadd.f32 %v359, 1.0
  %v377 = vadd.f32 %v360, 1.0
  %v378 = vadd.f32 %v361, 1.0
  %v379 = vadd.f32 %v362, 1.0
  %v380 = vrcp.pop %v363
  %v381 = vmul.f32 1.0, %v380
  %v382 = vrcp.pop %v364
  %v383 = vmul.f32 1.0, %v382
  %v384 = vrcp.pop %v365
  %v385 = vmul.f32 1.0, %v384
  %v386 = vrcp.pop %v366
  %v387 = vmul.f32 1.0, %v386
  %v388 = vrcp.pop %v367
  %v389 = vmul.f32 1.0, %v388
  %v390 = vrcp.pop %v368
  %v391 = vmul.f32 1.0, %v390
  %v392 = vrcp.pop %v369
  %v393 = vmul.f32 1.0, %v392
  %v394 = vrcp.pop %v370
  %v395 = vmul.f32 1.0, %v394
  %v396 = vrcp.pop %v371
  %v397 = vmul.f32 1.0, %v396
  %v398 = vrcp.pop %v372
  %v399 = vmul.f32 1.0, %v398
  %v400 = vrcp.pop %v373
  %v401 = vmul.f32 1.0, %v400
  %v402 = vrcp.pop %v374
  %v403 = vmul.f32 1.0, %v402
  %v404 = vrcp.pop %v375
  %v405 = vmul.f32 1.0, %v404
  %v406 = vrcp.pop %v376
  %v407 = vmul.f32 1.0, %v406
  %v408 = vrcp.pop %v377
  %v409 = vmul.f32 1.0, %v408
  %v410 = vrcp.pop %v378
  %v411 = vmul.f32 1.0, %v410
  %v412 = vrcp.pop %v379
  %v413 = vmul.f32 1.0, %v412
  %v414 = vmul.f32 %v381, 1.0614054
  %v415 = vmul.f32 %v383, 1.0614054
  %v416 = vmul.f32 %v385, 1.0614054
  %v417 = vmul.f32 %v387, 1.0614054
  %v418 = vmul.f32 %v389, 1.0614054
  %v419 = vmul.f32 %v391, 1.0614054
  %v420 = vmul.f32 %v393, 1.0614054
  %v421 = vmul.f32 %v395, 1.0614054
  %v422 = vmul.f32 %v397, 1.0614054
  %v423 = vmul.f32 %v399, 1.0614054
  %v424 = vmul.f32 %v401, 1.0614054
  %v425 = vmul.f32 %v403, 1.0614054
  %v426 = vmul.f32 %v405, 1.0614054
  %v427 = vmul.f32 %v407, 1.0614054
  %v428 = vmul.f32 %v409, 1.0614054
  %v429 = vmul.f32 %v411, 1.0614054
  %v430 = vmul.f32 %v413, 1.0614054
  %v431 = vadd.f32 %v414, -1.4531521
  %v432 = vadd.f32 %v415, -1.4531521
  %v433 = vadd.f32 %v416, -1.4531521
  %v434 = vadd.f32 %v417, -1.4531521
  %v435 = vadd.f32 %v418, -1.4531521
  %v436 = vadd.f32 %v419, -1.4531521
  %v437 = vadd.f32 %v420, -1.4531521
  %v438 = vadd.f32 %v421, -1.4531521
  %v439 = vadd.f32 %v422, -1.4531521
  %v440 = vadd.f32 %v423, -1.4531521
  %v441 = vadd.f32 %v424, -1.4531521
  %v442 = vadd.f32 %v425, -1.4531521
  %v443 = vadd.f32 %v426, -1.4531521
  %v444 = vadd.f32 %v427, -1.4531521
  %v445 = vadd.f32 %v428, -1.4531521
  %v446 = vadd.f32 %v429, -1.4531521
  %v447 = vadd.f32 %v430, -1.4531521
  %v448 = vmul.f32 %v431, %v381
  %v449 = vmul.f32 %v432, %v383
  %v450 = vmul.f32 %v433, %v385
  %v451 = vmul.f32 %v434, %v387
  %v452 = vmul.f32 %v435, %v389
  %v453 = vmul.f32 %v436, %v391
  %v454 = vmul.f32 %v437, %v393
  %v455 = vmul.f32 %v438, %v395
  %v456 = vmul.f32 %v439, %v397
  %v457 = vmul.f32 %v440, %v399
  %v458 = vmul.f32 %v441, %v401
  %v459 = vmul.f32 %v442, %v403
  %v460 = vmul.f32 %v443, %v405
  %v461 = vmul.f32 %v444, %v407
  %v462 = vmul.f32 %v445, %v409
  %v463 = vmul.f32 %v446, %v411
  %v464 = vmul.f32 %v447, %v413
  %v465 = vadd.f32 %v448, 1.4214138
  %v466 = vadd.f32 %v449, 1.4214138
  %v467 = vadd.f32 %v450, 1.4214138
  %v468 = vadd.f32 %v451, 1.4214138
  %v469 = vadd.f32 %v452, 1.4214138
  %v470 = vadd.f32 %v453, 1.4214138
  %v471 = vadd.f32 %v454, 1.4214138
  %v472 = vadd.f32 %v455, 1.4214138
  %v473 = vadd.f32 %v456, 1.4214138
  %v474 = vadd.f32 %v457, 1.4214138
  %v475 = vadd.f32 %v458, 1.4214138
  %v476 = vadd.f32 %v459, 1.4214138
  %v477 = vadd.f32 %v460, 1.4214138
  %v478 = vadd.f32 %v461, 1.4214138
  %v479 = vadd.f32 %v462, 1.4214138
  %v480 = vadd.f32 %v463, 1.4214138
  %v481 = vadd.f32 %v464, 1.4214138
  %v482 = vmul.f32 %v465, %v381
  %v483 = vmul.f32 %v466, %v383
  %v484 = vmul.f32 %v467, %v385
  %v485 = vmul.f32 %v468, %v387
  %v486 = vmul.f32 %v469, %v389
  %v487 = vmul.f32 %v470, %v391
  %v488 = vmul.f32 %v471, %v393
  %v489 = vmul.f32 %v472, %v395
  %v490 = vmul.f32 %v473, %v397
  %v491 = vmul.f32 %v474, %v399
  %v492 = vmul.f32 %v475, %v401
  %v493 = vmul.f32 %v476, %v403
  %v494 = vmul.f32 %v477, %v405
  %v495 = vmul.f32 %v478, %v407
  %v496 = vmul.f32 %v479, %v409
  %v497 = vmul.f32 %v480, %v411
  %v498 = vmul.f32 %v481, %v413
  %v499 = vadd.f32 %v482, -0.28449672
  %v500 = vadd.f32 %v483, -0.28449672
  %v501 = vadd.f32 %v484, -0.28449672
  %v502 = vadd.f32 %v485, -0.28449672
  %v503 = vadd.f32 %v486, -0.28449672
  %v504 = vadd.f32 %v487, -0.28449672
  %v505 = vadd.f32 %v488, -0.28449672
  %v506 = vadd.f32 %v489, -0.28449672
  %v507 = vadd.f32 %v490, -0.28449672
  %v508 = vadd.f32 %v491, -0.28449672
  %v509 = vadd.f32 %v492, -0.28449672
  %v510 = vadd.f32 %v493, -0.28449672
  %v511 = vadd.f32 %v494, -0.28449672
  %v512 = vadd.f32 %v495, -0.28449672
  %v513 = vadd.f32 %v496, -0.28449672
  %v514 = vadd.f32 %v497, -0.28449672
  %v515 = vadd.f32 %v498, -0.28449672
  %v516 = vmul.f32 %v499, %v381
  %v517 = vmul.f32 %v500, %v383
  %v518 = vmul.f32 %v501, %v385
  %v519 = vmul.f32 %v502, %v387
  %v520 = vmul.f32 %v503, %v389
  %v521 = vmul.f32 %v504, %v391
  %v522 = vmul.f32 %v505, %v393
  %v523 = vmul.f32 %v506, %v395
  %v524 = vmul.f32 %v507, %v397
  %v525 = vmul.f32 %v508, %v399
  %v526 = vmul.f32 %v509, %v401
  %v527 = vmul.f32 %v510, %v403
  %v528 = vmul.f32 %v511, %v405
  %v529 = vmul.f32 %v512, %v407
  %v530 = vmul.f32 %v513, %v409
  %v531 = vmul.f32 %v514, %v411
  %v532 = vmul.f32 %v515, %v413
  %v533 = vadd.f32 %v516, 0.2548296
  %v534 = vadd.f32 %v517, 0.2548296
  %v535 = vadd.f32 %v518, 0.2548296
  %v536 = vadd.f32 %v519, 0.2548296
  %v537 = vadd.f32 %v520, 0.2548296
  %v538 = vadd.f32 %v521, 0.2548296
  %v539 = vadd.f32 %v522, 0.2548296
  %v540 = vadd.f32 %v523, 0.2548296
  %v541 = vadd.f32 %v524, 0.2548296
  %v542 = vadd.f32 %v525, 0.2548296
  %v543 = vadd.f32 %v526, 0.2548296
  %v544 = vadd.f32 %v527, 0.2548296
  %v545 = vadd.f32 %v528, 0.2548296
  %v546 = vadd.f32 %v529, 0.2548296
  %v547 = vadd.f32 %v530, 0.2548296
  %v548 = vadd.f32 %v531, 0.2548296
  %v549 = vadd.f32 %v532, 0.2548296
  %v550 = vmul.f32 %v533, %v381
  %v551 = vmul.f32 %v534, %v383
  %v552 = vmul.f32 %v535, %v385
  %v553 = vmul.f32 %v536, %v387
  %v554 = vmul.f32 %v537, %v389
  %v555 = vmul.f32 %v538, %v391
  %v556 = vmul.f32 %v539, %v393
  %v557 = vmul.f32 %v540, %v395
  %v558 = vmul.f32 %v541, %v397
  %v559 = vmul.f32 %v542, %v399
  %v560 = vmul.f32 %v543, %v401
  %v561 = vmul.f32 %v544, %v403
  %v562 = vmul.f32 %v545, %v405
  %v563 = vmul.f32 %v546, %v407
  %v564 = vmul.f32 %v547, %v409
  %v565 = vmul.f32 %v548, %v411
  %v566 = vmul.f32 %v549, %v413
  %v567 = vsub.f32 0.0, %v329
  %v568 = vsub.f32 0.0, %v330
  %v569 = vsub.f32 0.0, %v331
  %v570 = vsub.f32 0.0, %v332
  %v571 = vsub.f32 0.0, %v333
  %v572 = vsub.f32 0.0, %v334
  %v573 = vsub.f32 0.0, %v335
  %v574 = vsub.f32 0.0, %v336
  %v575 = vsub.f32 0.0, %v337
  %v576 = vsub.f32 0.0, %v338
  %v577 = vsub.f32 0.0, %v339
  %v578 = vsub.f32 0.0, %v340
  %v579 = vsub.f32 0.0, %v341
  %v580 = vsub.f32 0.0, %v342
  %v581 = vsub.f32 0.0, %v343
  %v582 = vsub.f32 0.0, %v344
  %v583 = vsub.f32 0.0, %v345
  %v584 = vmul.f32 %v567, %v329
  %v585 = vmul.f32 %v568, %v330
  %v586 = vmul.f32 %v569, %v331
  %v587 = vmul.f32 %v570, %v332
  %v588 = vmul.f32 %v571, %v333
  %v589 = vmul.f32 %v572, %v334
  %v590 = vmul.f32 %v573, %v335
  %v591 = vmul.f32 %v574, %v336
  %v592 = vmul.f32 %v575, %v337
  %v593 = vmul.f32 %v576, %v338
  %v594 = vmul.f32 %v577, %v339
  %v595 = vmul.f32 %v578, %v340
  %v596 = vmul.f32 %v579, %v341
  %v597 = vmul.f32 %v580, %v342
  %v598 = vmul.f32 %v581, %v343
  %v599 = vmul.f32 %v582, %v344
  %v600 = vmul.f32 %v583, %v345
  %v601 = vmul.f32 %v584, 1.442695
  %v602 = vpow.pop %v601
  %v603 = vmul.f32 %v585, 1.442695
  %v604 = vpow.pop %v603
  %v605 = vmul.f32 %v586, 1.442695
  %v606 = vpow.pop %v605
  %v607 = vmul.f32 %v587, 1.442695
  %v608 = vpow.pop %v607
  %v609 = vmul.f32 %v588, 1.442695
  %v610 = vpow.pop %v609
  %v611 = vmul.f32 %v589, 1.442695
  %v612 = vpow.pop %v611
  %v613 = vmul.f32 %v590, 1.442695
  %v614 = vpow.pop %v613
  %v615 = vmul.f32 %v591, 1.442695
  %v616 = vpow.pop %v615
  %v617 = vmul.f32 %v592, 1.442695
  %v618 = vpow.pop %v617
  %v619 = vmul.f32 %v593, 1.442695
  %v620 = vpow.pop %v619
  %v621 = vmul.f32 %v594, 1.442695
  %v622 = vpow.pop %v621
  %v623 = vmul.f32 %v595, 1.442695
  %v624 = vpow.pop %v623
  %v625 = vmul.f32 %v596, 1.442695
  %v626 = vpow.pop %v625
  %v627 = vmul.f32 %v597, 1.442695
  %v628 = vpow.pop %v627
  %v629 = vmul.f32 %v598, 1.442695
  %v630 = vpow.pop %v629
  %v631 = vmul.f32 %v599, 1.442695
  %v632 = vpow.pop %v631
  %v633 = vmul.f32 %v600, 1.442695
  %v634 = vpow.pop %v633
  %v635 = vmul.f32 %v550, %v602
  %v636 = vmul.f32 %v551, %v604
  %v637 = vmul.f32 %v552, %v606
  %v638 = vmul.f32 %v553, %v608
  %v639 = vmul.f32 %v554, %v610
  %v640 = vmul.f32 %v555, %v612
  %v641 = vmul.f32 %v556, %v614
  %v642 = vmul.f32 %v557, %v616
  %v643 = vmul.f32 %v558, %v618
  %v644 = vmul.f32 %v559, %v620
  %v645 = vmul.f32 %v560, %v622
  %v646 = vmul.f32 %v561, %v624
  %v647 = vmul.f32 %v562, %v626
  %v648 = vmul.f32 %v563, %v628
  %v649 = vmul.f32 %v564, %v630
  %v650 = vmul.f32 %v565, %v632
  %v651 = vmul.f32 %v566, %v634
  %v652 = vsub.f32 1.0, %v635
  %v653 = vsub.f32 1.0, %v636
  %v654 = vsub.f32 1.0, %v637
  %v655 = vsub.f32 1.0, %v638
  %v656 = vsub.f32 1.0, %v639
  %v657 = vsub.f32 1.0, %v640
  %v658 = vsub.f32 1.0, %v641
  %v659 = vsub.f32 1.0, %v642
  %v660 = vsub.f32 1.0, %v643
  %v661 = vsub.f32 1.0, %v644
  %v662 = vsub.f32 1.0, %v645
  %v663 = vsub.f32 1.0, %v646
  %v664 = vsub.f32 1.0, %v647
  %v665 = vsub.f32 1.0, %v648
  %v666 = vsub.f32 1.0, %v649
  %v667 = vsub.f32 1.0, %v650
  %v668 = vsub.f32 1.0, %v651
  %v669 = vmul.f32 %v312, %v652
  %v670 = vmul.f32 %v313, %v653
  %v671 = vmul.f32 %v314, %v654
  %v672 = vmul.f32 %v315, %v655
  %v673 = vmul.f32 %v316, %v656
  %v674 = vmul.f32 %v317, %v657
  %v675 = vmul.f32 %v318, %v658
  %v676 = vmul.f32 %v319, %v659
  %v677 = vmul.f32 %v320, %v660
  %v678 = vmul.f32 %v321, %v661
  %v679 = vmul.f32 %v322, %v662
  %v680 = vmul.f32 %v323, %v663
  %v681 = vmul.f32 %v324, %v664
  %v682 = vmul.f32 %v325, %v665
  %v683 = vmul.f32 %v326, %v666
  %v684 = vmul.f32 %v327, %v667
  %v685 = vmul.f32 %v328, %v668
  %v686 = vadd.f32 %v669, 1.0
  %v687 = vadd.f32 %v670, 1.0
  %v688 = vadd.f32 %v671, 1.0
  %v689 = vadd.f32 %v672, 1.0
  %v690 = vadd.f32 %v673, 1.0
  %v691 = vadd.f32 %v674, 1.0
  %v692 = vadd.f32 %v675, 1.0
  %v693 = vadd.f32 %v676, 1.0
  %v694 = vadd.f32 %v677, 1.0
  %v695 = vadd.f32 %v678, 1.0
  %v696 = vadd.f32 %v679, 1.0
  %v697 = vadd.f32 %v680, 1.0
  %v698 = vadd.f32 %v681, 1.0
  %v699 = vadd.f32 %v682, 1.0
  %v700 = vadd.f32 %v683, 1.0
  %v701 = vadd.f32 %v684, 1.0
  %v702 = vadd.f32 %v685, 1.0
  %v703 = vmul.f32 %v261, %v686
  %v704 = vmul.f32 %v262, %v687
  %v705 = vmul.f32 %v263, %v688
  %v706 = vmul.f32 %v264, %v689
  %v707 = vmul.f32 %v265, %v690
  %v708 = vmul.f32 %v266, %v691
  %v709 = vmul.f32 %v267, %v692
  %v710 = vmul.f32 %v268, %v693
  %v711 = vmul.f32 %v269, %v694
  %v712 = vmul.f32 %v270, %v695
  %v713 = vmul.f32 %v271, %v696
  %v714 = vmul.f32 %v272, %v697
  %v715 = vmul.f32 %v273, %v698
  %v716 = vmul.f32 %v274, %v699
  %v717 = vmul.f32 %v275, %v700
  %v718 = vmul.f32 %v276, %v701
  %v719 = vmul.f32 %v277, %v702
  %v720 = vld [vmem:[%s3] sm:$0xff]
  %v721 = vld [vmem:[%s3 + $0x8] sm:$0xff]
  %v722 = vld [vmem:[%s3 + $0x10] sm:$0xff]
  %v723 = vld [vmem:[%s3 + $0x18] sm:$0xff]
  %v724 = vld [vmem:[%s3 + $0x20] sm:$0xff]
  %v725 = vld [vmem:[%s3 + $0x28] sm:$0xff]
  %v726 = vld [vmem:[%s3 + $0x30] sm:$0xff]
  %v727 = vld [vmem:[%s3 + $0x38] sm:$0xff]
  %v728 = vld [vmem:[%s4] sm:$0x1]
  %v730 = vlaneseq
  %v731 = vshrl.u32 %v730, 7
  %v732 = vsub.s32 0, %v731
  %v733 = vrot.slane %v728, %v732
  %vm735 = vcmask 523264
  %v737 = vsel %vm735, %v703, 0
  %v740 = vsel %vm735, %v704, 0
  %v743 = vsel %vm735, %v705, 0
  %v746 = vsel %vm735, %v706, 0
  %v749 = vsel %vm735, %v707, 0
  %v752 = vsel %vm735, %v708, 0
  %v755 = vsel %vm735, %v709, 0
  %v758 = vsel %vm735, %v710, 0
  %v761 = vsel %vm735, %v711, 0
  %v764 = vsel %vm735, %v712, 0
  %v767 = vsel %vm735, %v713, 0
  %v770 = vsel %vm735, %v714, 0
  %v773 = vsel %vm735, %v715, 0
  %v776 = vsel %vm735, %v716, 0
  %v779 = vsel %vm735, %v717, 0
  %v782 = vsel %vm735, %v718, 0
  %v785 = vsel %vm735, %v719, 0
  %787 = vmatprep.subr.mxu0 0.0
  %788 = vmatpush1.msra.mxu0 0.0
  %789 = vmatprep.subr.mxu0 0.0
  %790 = vmatpush1.msra.mxu0 0.0
  %791 = vmatprep.subr.mxu0 0.0
  %792 = vmatpush1.msra.mxu0 0.0
  %793 = vmatprep.subr.mxu0 0.0
  %794 = vmatpush1.msra.mxu0 0.0
  %795 = vmatprep.subr.mxu0 0.0
  %796 = vmatpush1.msra.mxu0 0.0
  %797 = vmatprep.subr.mxu0 0.0
  %798 = vmatpush1.msra.mxu0 0.0
  %799 = vmatprep.subr.mxu0 0.0
  %800 = vmatpush1.msra.mxu0 0.0
  %801 = vmatprep.subr.mxu0 0.0
  %802 = vmatpush1.msra.mxu0 0.0
  %803 = vmatprep.subr.mxu0 0.0
  %804 = vmatpush1.msra.mxu0 %v727
  %805 = vmatprep.subr.mxu0 0.0
  %806 = vmatpush1.msra.mxu0 %v726
  %807 = vmatprep.subr.mxu0 0.0
  %808 = vmatpush1.msra.mxu0 %v725
  %809 = vmatprep.subr.mxu0 0.0
  %810 = vmatpush1.msra.mxu0 %v724
  %811 = vmatprep.subr.mxu0 0.0
  %812 = vmatpush1.msra.mxu0 %v723
  %813 = vmatprep.subr.mxu0 0.0
  %814 = vmatpush1.msra.mxu0 %v722
  %815 = vmatprep.subr.mxu0 0.0
  %816 = vmatpush1.msra.mxu0 %v721
  %817 = vmatprep.subr.mxu0 0.0
  %818 = vmatpush1.msra.mxu0 %v720
  %819 = vmatprep.subr.mxu0 0.0
  %820 = vmatpush2.msra.mxu0 0.0
  %821 = vmatprep.subr.mxu0 0.0
  %822 = vmatpush2.msra.mxu0 0.0
  %823 = vmatprep.subr.mxu0 0.0
  %824 = vmatpush2.msra.mxu0 0.0
  %825 = vmatprep.subr.mxu0 0.0
  %826 = vmatpush2.msra.mxu0 0.0
  %827 = vmatprep.subr.mxu0 0.0
  %828 = vmatpush2.msra.mxu0 0.0
  %829 = vmatprep.subr.mxu0 0.0
  %830 = vmatpush2.msra.mxu0 0.0
  %831 = vmatprep.subr.mxu0 0.0
  %832 = vmatpush2.msra.mxu0 0.0
  %833 = vmatprep.subr.mxu0 0.0
  %834 = vmatpush2.msra.mxu0 0.0
  %835 = vmatprep.subr.mxu0 0.0
  %836 = vmatpush2.msra.mxu0 0.0
  %837 = vmatprep.subr.mxu0 0.0
  %838 = vmatpush2.msra.mxu0 0.0
  %839 = vmatprep.subr.mxu0 0.0
  %840 = vmatpush2.msra.mxu0 0.0
  %841 = vmatprep.subr.mxu0 0.0
  %842 = vmatpush2.msra.mxu0 0.0
  %843 = vmatprep.subr.mxu0 0.0
  %844 = vmatpush2.msra.mxu0 0.0
  %845 = vmatprep.subr.mxu0 0.0
  %846 = vmatpush2.msra.mxu0 0.0
  %847 = vmatprep.subr.mxu0 0.0
  %848 = vmatpush2.msra.mxu0 0.0
  %849 = vmatprep.subr.mxu0 0.0
  %850 = vmatpush2.msra.mxu0 0.0
  %851 = vmatprep.mubr.f32.mxu0 0.0
  %852 = vmatmul.mubr.f32.gmra.mxu0 %v737
  %v853 = vpop.f32.mrf.mxu0
  %v854 = vadd.f32 %v733, %v853
  %v855 = vpop.f32.mrf.mxu0
  %856 = vmatprep.mubr.f32.mxu0 0.0
  %857 = vmatmul.mubr.f32.gmra.mxu0 %v740
  %v858 = vpop.f32.mrf.mxu0
  %v859 = vadd.f32 %v733, %v858
  %v860 = vpop.f32.mrf.mxu0
  %861 = vmatprep.mubr.f32.mxu0 0.0
  %862 = vmatmul.mubr.f32.gmra.mxu0 %v743
  %v863 = vpop.f32.mrf.mxu0
  %v864 = vadd.f32 %v733, %v863
  %v865 = vpop.f32.mrf.mxu0
  %866 = vmatprep.mubr.f32.mxu0 0.0
  %867 = vmatmul.mubr.f32.gmra.mxu0 %v746
  %v868 = vpop.f32.mrf.mxu0
  %v869 = vadd.f32 %v733, %v868
  %v870 = vpop.f32.mrf.mxu0
  %871 = vmatprep.mubr.f32.mxu0 0.0
  %872 = vmatmul.mubr.f32.gmra.mxu0 %v749
  %v873 = vpop.f32.mrf.mxu0
  %v874 = vadd.f32 %v733, %v873
  %v875 = vpop.f32.mrf.mxu0
  %876 = vmatprep.mubr.f32.mxu0 0.0
  %877 = vmatmul.mubr.f32.gmra.mxu0 %v752
  %v878 = vpop.f32.mrf.mxu0
  %v879 = vadd.f32 %v733, %v878
  %v880 = vpop.f32.mrf.mxu0
  %881 = vmatprep.mubr.f32.mxu0 0.0
  %882 = vmatmul.mubr.f32.gmra.mxu0 %v755
  %v883 = vpop.f32.mrf.mxu0
  %v884 = vadd.f32 %v733, %v883
  %v885 = vpop.f32.mrf.mxu0
  %886 = vmatprep.mubr.f32.mxu0 0.0
  %887 = vmatmul.mubr.f32.gmra.mxu0 %v758
  %v888 = vpop.f32.mrf.mxu0
  %v889 = vadd.f32 %v733, %v888
  %v890 = vpop.f32.mrf.mxu0
  %891 = vmatprep.mubr.f32.mxu0 0.0
  %892 = vmatmul.mubr.f32.gmra.mxu0 %v761
  %v893 = vpop.f32.mrf.mxu0
  %v894 = vadd.f32 %v733, %v893
  %v895 = vpop.f32.mrf.mxu0
  %896 = vmatprep.mubr.f32.mxu0 0.0
  %897 = vmatmul.mubr.f32.gmra.mxu0 %v764
  %v898 = vpop.f32.mrf.mxu0
  %v899 = vadd.f32 %v733, %v898
  %v900 = vpop.f32.mrf.mxu0
  %901 = vmatprep.mubr.f32.mxu0 0.0
  %902 = vmatmul.mubr.f32.gmra.mxu0 %v767
  %v903 = vpop.f32.mrf.mxu0
  %v904 = vadd.f32 %v733, %v903
  %v905 = vpop.f32.mrf.mxu0
  %906 = vmatprep.mubr.f32.mxu0 0.0
  %907 = vmatmul.mubr.f32.gmra.mxu0 %v770
  %v908 = vpop.f32.mrf.mxu0
  %v909 = vadd.f32 %v733, %v908
  %v910 = vpop.f32.mrf.mxu0
  %911 = vmatprep.mubr.f32.mxu0 0.0
  %912 = vmatmul.mubr.f32.gmra.mxu0 %v773
  %v913 = vpop.f32.mrf.mxu0
  %v914 = vadd.f32 %v733, %v913
  %v915 = vpop.f32.mrf.mxu0
  %916 = vmatprep.mubr.f32.mxu0 0.0
  %917 = vmatmul.mubr.f32.gmra.mxu0 %v776
  %v918 = vpop.f32.mrf.mxu0
  %v919 = vadd.f32 %v733, %v918
  %v920 = vpop.f32.mrf.mxu0
  %921 = vmatprep.mubr.f32.mxu0 0.0
  %922 = vmatmul.mubr.f32.gmra.mxu0 %v779
  %v923 = vpop.f32.mrf.mxu0
  %v924 = vadd.f32 %v733, %v923
  %v925 = vpop.f32.mrf.mxu0
  %926 = vmatprep.mubr.f32.mxu0 0.0
  %927 = vmatmul.mubr.f32.gmra.mxu0 %v782
  %v928 = vpop.f32.mrf.mxu0
  %v929 = vadd.f32 %v733, %v928
  %v930 = vpop.f32.mrf.mxu0
  %931 = vmatprep.mubr.f32.mxu0 0.0
  %932 = vmatmul.mubr.f32.gmra.mxu0 %v785
  %v933 = vpop.f32.mrf.mxu0
  %v934 = vadd.f32 %v733, %v933
  %v935 = vpop.f32.mrf.mxu0
  %936 = vdwg.mxu0
  %v937 = vmax.f32 %v854, 0.0
  %v938 = vmax.f32 %v859, 0.0
  %v939 = vmax.f32 %v864, 0.0
  %v940 = vmax.f32 %v869, 0.0
  %v941 = vmax.f32 %v874, 0.0
  %v942 = vmax.f32 %v879, 0.0
  %v943 = vmax.f32 %v884, 0.0
  %v944 = vmax.f32 %v889, 0.0
  %v945 = vmax.f32 %v894, 0.0
  %v946 = vmax.f32 %v899, 0.0
  %v947 = vmax.f32 %v904, 0.0
  %v948 = vmax.f32 %v909, 0.0
  %v949 = vmax.f32 %v914, 0.0
  %v950 = vmax.f32 %v919, 0.0
  %v951 = vmax.f32 %v924, 0.0
  %v952 = vmax.f32 %v929, 0.0
  %v953 = vmax.f32 %v934, 0.0
  %v954 = vadd.f32 %v937, 1.0
  %v955 = vadd.f32 %v938, 1.0
  %v956 = vadd.f32 %v939, 1.0
  %v957 = vadd.f32 %v940, 1.0
  %v958 = vadd.f32 %v941, 1.0
  %v959 = vadd.f32 %v942, 1.0
  %v960 = vadd.f32 %v943, 1.0
  %v961 = vadd.f32 %v944, 1.0
  %v962 = vadd.f32 %v945, 1.0
  %v963 = vadd.f32 %v946, 1.0
  %v964 = vadd.f32 %v947, 1.0
  %v965 = vadd.f32 %v948, 1.0
  %v966 = vadd.f32 %v949, 1.0
  %v967 = vadd.f32 %v950, 1.0
  %v968 = vadd.f32 %v951, 1.0
  %v969 = vadd.f32 %v952, 1.0
  %v970 = vadd.f32 %v953, 1.0
  %v971 = vtanh.pop %v854
  %v972 = vtanh.pop %v859
  %v973 = vtanh.pop %v864
  %v974 = vtanh.pop %v869
  %v975 = vtanh.pop %v874
  %v976 = vtanh.pop %v879
  %v977 = vtanh.pop %v884
  %v978 = vtanh.pop %v889
  %v979 = vtanh.pop %v894
  %v980 = vtanh.pop %v899
  %v981 = vtanh.pop %v904
  %v982 = vtanh.pop %v909
  %v983 = vtanh.pop %v914
  %v984 = vtanh.pop %v919
  %v985 = vtanh.pop %v924
  %v986 = vtanh.pop %v929
  %v987 = vtanh.pop %v934
  %v988 = vmul.f32 %v971, 0.99
  %v989 = vmul.f32 %v972, 0.99
  %v990 = vmul.f32 %v973, 0.99
  %v991 = vmul.f32 %v974, 0.99
  %v992 = vmul.f32 %v975, 0.99
  %v993 = vmul.f32 %v976, 0.99
  %v994 = vmul.f32 %v977, 0.99
  %v995 = vmul.f32 %v978, 0.99
  %v996 = vmul.f32 %v979, 0.99
  %v997 = vmul.f32 %v980, 0.99
  %v998 = vmul.f32 %v981, 0.99
  %v999 = vmul.f32 %v982, 0.99
  %v1000 = vmul.f32 %v983, 0.99
  %v1001 = vmul.f32 %v984, 0.99
  %v1002 = vmul.f32 %v985, 0.99
  %v1003 = vmul.f32 %v986, 0.99
  %v1004 = vmul.f32 %v987, 0.99
  %v1005 = vmul.f32 %v954, %v954
  %v1006 = vmul.f32 %v955, %v955
  %v1007 = vmul.f32 %v956, %v956
  %v1008 = vmul.f32 %v957, %v957
  %v1009 = vmul.f32 %v958, %v958
  %v1010 = vmul.f32 %v959, %v959
  %v1011 = vmul.f32 %v960, %v960
  %v1012 = vmul.f32 %v961, %v961
  %v1013 = vmul.f32 %v962, %v962
  %v1014 = vmul.f32 %v963, %v963
  %v1015 = vmul.f32 %v964, %v964
  %v1016 = vmul.f32 %v965, %v965
  %v1017 = vmul.f32 %v966, %v966
  %v1018 = vmul.f32 %v967, %v967
  %v1019 = vmul.f32 %v968, %v968
  %v1020 = vmul.f32 %v969, %v969
  %v1021 = vmul.f32 %v970, %v970
  %1039 = vrot.lane.b32.xlu0 %v954, 2
  %v1040 = vpop.permute.xlu0 %1039
  %1041 = vrot.lane.b32.xlu0 %v955, 2
  %v1042 = vpop.permute.xlu0 %1041
  %1043 = vrot.lane.b32.xlu0 %v956, 2
  %v1044 = vpop.permute.xlu0 %1043
  %1045 = vrot.lane.b32.xlu0 %v957, 2
  %v1046 = vpop.permute.xlu0 %1045
  %1047 = vrot.lane.b32.xlu0 %v958, 2
  %v1048 = vpop.permute.xlu0 %1047
  %1049 = vrot.lane.b32.xlu0 %v959, 2
  %v1050 = vpop.permute.xlu0 %1049
  %1051 = vrot.lane.b32.xlu0 %v960, 2
  %v1052 = vpop.permute.xlu0 %1051
  %1053 = vrot.lane.b32.xlu0 %v961, 2
  %v1054 = vpop.permute.xlu0 %1053
  %1055 = vrot.lane.b32.xlu0 %v962, 2
  %v1056 = vpop.permute.xlu0 %1055
  %1057 = vrot.lane.b32.xlu0 %v963, 2
  %v1058 = vpop.permute.xlu0 %1057
  %1059 = vrot.lane.b32.xlu0 %v964, 2
  %v1060 = vpop.permute.xlu0 %1059
  %1061 = vrot.lane.b32.xlu0 %v965, 2
  %v1062 = vpop.permute.xlu0 %1061
  %1063 = vrot.lane.b32.xlu0 %v966, 2
  %v1064 = vpop.permute.xlu0 %1063
  %1065 = vrot.lane.b32.xlu0 %v967, 2
  %v1066 = vpop.permute.xlu0 %1065
  %1067 = vrot.lane.b32.xlu0 %v968, 2
  %v1068 = vpop.permute.xlu0 %1067
  %1069 = vrot.lane.b32.xlu0 %v969, 2
  %v1070 = vpop.permute.xlu0 %1069
  %1071 = vrot.lane.b32.xlu0 %v970, 2
  %v1072 = vpop.permute.xlu0 %1071
  %v1090 = vmul.f32 %v988, %v1040
  %v1091 = vmul.f32 %v989, %v1042
  %v1092 = vmul.f32 %v990, %v1044
  %v1093 = vmul.f32 %v991, %v1046
  %v1094 = vmul.f32 %v992, %v1048
  %v1095 = vmul.f32 %v993, %v1050
  %v1096 = vmul.f32 %v994, %v1052
  %v1097 = vmul.f32 %v995, %v1054
  %v1098 = vmul.f32 %v996, %v1056
  %v1099 = vmul.f32 %v997, %v1058
  %v1100 = vmul.f32 %v998, %v1060
  %v1101 = vmul.f32 %v999, %v1062
  %v1102 = vmul.f32 %v1000, %v1064
  %v1103 = vmul.f32 %v1001, %v1066
  %v1104 = vmul.f32 %v1002, %v1068
  %v1105 = vmul.f32 %v1003, %v1070
  %v1106 = vmul.f32 %v1004, %v1072
  %1107 = vrot.lane.b32.xlu0 %v954, 1
  %v1108 = vpop.permute.xlu0 %1107
  %1109 = vrot.lane.b32.xlu0 %v955, 1
  %v1110 = vpop.permute.xlu0 %1109
  %1111 = vrot.lane.b32.xlu0 %v956, 1
  %v1112 = vpop.permute.xlu0 %1111
  %1113 = vrot.lane.b32.xlu0 %v957, 1
  %v1114 = vpop.permute.xlu0 %1113
  %1115 = vrot.lane.b32.xlu0 %v958, 1
  %v1116 = vpop.permute.xlu0 %1115
  %1117 = vrot.lane.b32.xlu0 %v959, 1
  %v1118 = vpop.permute.xlu0 %1117
  %1119 = vrot.lane.b32.xlu0 %v960, 1
  %v1120 = vpop.permute.xlu0 %1119
  %1121 = vrot.lane.b32.xlu0 %v961, 1
  %v1122 = vpop.permute.xlu0 %1121
  %1123 = vrot.lane.b32.xlu0 %v962, 1
  %v1124 = vpop.permute.xlu0 %1123
  %1125 = vrot.lane.b32.xlu0 %v963, 1
  %v1126 = vpop.permute.xlu0 %1125
  %1127 = vrot.lane.b32.xlu0 %v964, 1
  %v1128 = vpop.permute.xlu0 %1127
  %1129 = vrot.lane.b32.xlu0 %v965, 1
  %v1130 = vpop.permute.xlu0 %1129
  %1131 = vrot.lane.b32.xlu0 %v966, 1
  %v1132 = vpop.permute.xlu0 %1131
  %1133 = vrot.lane.b32.xlu0 %v967, 1
  %v1134 = vpop.permute.xlu0 %1133
  %1135 = vrot.lane.b32.xlu0 %v968, 1
  %v1136 = vpop.permute.xlu0 %1135
  %1137 = vrot.lane.b32.xlu0 %v969, 1
  %v1138 = vpop.permute.xlu0 %1137
  %1139 = vrot.lane.b32.xlu0 %v970, 1
  %v1140 = vpop.permute.xlu0 %1139
  %v1158 = vmul.f32 %v1090, %v1108
  %v1159 = vmul.f32 %v1091, %v1110
  %v1160 = vmul.f32 %v1092, %v1112
  %v1161 = vmul.f32 %v1093, %v1114
  %v1162 = vmul.f32 %v1094, %v1116
  %v1163 = vmul.f32 %v1095, %v1118
  %v1164 = vmul.f32 %v1096, %v1120
  %v1165 = vmul.f32 %v1097, %v1122
  %v1166 = vmul.f32 %v1098, %v1124
  %v1167 = vmul.f32 %v1099, %v1126
  %v1168 = vmul.f32 %v1100, %v1128
  %v1169 = vmul.f32 %v1101, %v1130
  %v1170 = vmul.f32 %v1102, %v1132
  %v1171 = vmul.f32 %v1103, %v1134
  %v1172 = vmul.f32 %v1104, %v1136
  %v1173 = vmul.f32 %v1105, %v1138
  %v1174 = vmul.f32 %v1106, %v1140
  %1192 = vrot.lane.b32.xlu0 %v1005, 127
  %v1193 = vpop.permute.xlu0 %1192
  %1194 = vrot.lane.b32.xlu0 %v1006, 127
  %v1195 = vpop.permute.xlu0 %1194
  %1196 = vrot.lane.b32.xlu0 %v1007, 127
  %v1197 = vpop.permute.xlu0 %1196
  %1198 = vrot.lane.b32.xlu0 %v1008, 127
  %v1199 = vpop.permute.xlu0 %1198
  %1200 = vrot.lane.b32.xlu0 %v1009, 127
  %v1201 = vpop.permute.xlu0 %1200
  %1202 = vrot.lane.b32.xlu0 %v1010, 127
  %v1203 = vpop.permute.xlu0 %1202
  %1204 = vrot.lane.b32.xlu0 %v1011, 127
  %v1205 = vpop.permute.xlu0 %1204
  %1206 = vrot.lane.b32.xlu0 %v1012, 127
  %v1207 = vpop.permute.xlu0 %1206
  %1208 = vrot.lane.b32.xlu0 %v1013, 127
  %v1209 = vpop.permute.xlu0 %1208
  %1210 = vrot.lane.b32.xlu0 %v1014, 127
  %v1211 = vpop.permute.xlu0 %1210
  %1212 = vrot.lane.b32.xlu0 %v1015, 127
  %v1213 = vpop.permute.xlu0 %1212
  %1214 = vrot.lane.b32.xlu0 %v1016, 127
  %v1215 = vpop.permute.xlu0 %1214
  %1216 = vrot.lane.b32.xlu0 %v1017, 127
  %v1217 = vpop.permute.xlu0 %1216
  %1218 = vrot.lane.b32.xlu0 %v1018, 127
  %v1219 = vpop.permute.xlu0 %1218
  %1220 = vrot.lane.b32.xlu0 %v1019, 127
  %v1221 = vpop.permute.xlu0 %1220
  %1222 = vrot.lane.b32.xlu0 %v1020, 127
  %v1223 = vpop.permute.xlu0 %1222
  %1224 = vrot.lane.b32.xlu0 %v1021, 127
  %v1225 = vpop.permute.xlu0 %1224
  %v1243 = vmul.f32 %v1005, %v1193
  %v1244 = vmul.f32 %v1006, %v1195
  %v1245 = vmul.f32 %v1007, %v1197
  %v1246 = vmul.f32 %v1008, %v1199
  %v1247 = vmul.f32 %v1009, %v1201
  %v1248 = vmul.f32 %v1010, %v1203
  %v1249 = vmul.f32 %v1011, %v1205
  %v1250 = vmul.f32 %v1012, %v1207
  %v1251 = vmul.f32 %v1013, %v1209
  %v1252 = vmul.f32 %v1014, %v1211
  %v1253 = vmul.f32 %v1015, %v1213
  %v1254 = vmul.f32 %v1016, %v1215
  %v1255 = vmul.f32 %v1017, %v1217
  %v1256 = vmul.f32 %v1018, %v1219
  %v1257 = vmul.f32 %v1019, %v1221
  %v1258 = vmul.f32 %v1020, %v1223
  %v1259 = vmul.f32 %v1021, %v1225
  %v1260 = vmul.f32 %v1158, %v1158
  %v1261 = vmul.f32 %v1159, %v1159
  %v1262 = vmul.f32 %v1160, %v1160
  %v1263 = vmul.f32 %v1161, %v1161
  %v1264 = vmul.f32 %v1162, %v1162
  %v1265 = vmul.f32 %v1163, %v1163
  %v1266 = vmul.f32 %v1164, %v1164
  %v1267 = vmul.f32 %v1165, %v1165
  %v1268 = vmul.f32 %v1166, %v1166
  %v1269 = vmul.f32 %v1167, %v1167
  %v1270 = vmul.f32 %v1168, %v1168
  %v1271 = vmul.f32 %v1169, %v1169
  %v1272 = vmul.f32 %v1170, %v1170
  %v1273 = vmul.f32 %v1171, %v1171
  %v1274 = vmul.f32 %v1172, %v1172
  %v1275 = vmul.f32 %v1173, %v1173
  %v1276 = vmul.f32 %v1174, %v1174
  %1294 = vrot.lane.b32.xlu0 %v1260, 126
  %v1295 = vpop.permute.xlu0 %1294
  %1296 = vrot.lane.b32.xlu0 %v1261, 126
  %v1297 = vpop.permute.xlu0 %1296
  %1298 = vrot.lane.b32.xlu0 %v1262, 126
  %v1299 = vpop.permute.xlu0 %1298
  %1300 = vrot.lane.b32.xlu0 %v1263, 126
  %v1301 = vpop.permute.xlu0 %1300
  %1302 = vrot.lane.b32.xlu0 %v1264, 126
  %v1303 = vpop.permute.xlu0 %1302
  %1304 = vrot.lane.b32.xlu0 %v1265, 126
  %v1305 = vpop.permute.xlu0 %1304
  %1306 = vrot.lane.b32.xlu0 %v1266, 126
  %v1307 = vpop.permute.xlu0 %1306
  %1308 = vrot.lane.b32.xlu0 %v1267, 126
  %v1309 = vpop.permute.xlu0 %1308
  %1310 = vrot.lane.b32.xlu0 %v1268, 126
  %v1311 = vpop.permute.xlu0 %1310
  %1312 = vrot.lane.b32.xlu0 %v1269, 126
  %v1313 = vpop.permute.xlu0 %1312
  %1314 = vrot.lane.b32.xlu0 %v1270, 126
  %v1315 = vpop.permute.xlu0 %1314
  %1316 = vrot.lane.b32.xlu0 %v1271, 126
  %v1317 = vpop.permute.xlu0 %1316
  %1318 = vrot.lane.b32.xlu0 %v1272, 126
  %v1319 = vpop.permute.xlu0 %1318
  %1320 = vrot.lane.b32.xlu0 %v1273, 126
  %v1321 = vpop.permute.xlu0 %1320
  %1322 = vrot.lane.b32.xlu0 %v1274, 126
  %v1323 = vpop.permute.xlu0 %1322
  %1324 = vrot.lane.b32.xlu0 %v1275, 126
  %v1325 = vpop.permute.xlu0 %1324
  %1326 = vrot.lane.b32.xlu0 %v1276, 126
  %v1327 = vpop.permute.xlu0 %1326
  %v1345 = vsub.f32 %v1243, %v1295
  %v1346 = vsub.f32 %v1244, %v1297
  %v1347 = vsub.f32 %v1245, %v1299
  %v1348 = vsub.f32 %v1246, %v1301
  %v1349 = vsub.f32 %v1247, %v1303
  %v1350 = vsub.f32 %v1248, %v1305
  %v1351 = vsub.f32 %v1249, %v1307
  %v1352 = vsub.f32 %v1250, %v1309
  %v1353 = vsub.f32 %v1251, %v1311
  %v1354 = vsub.f32 %v1252, %v1313
  %v1355 = vsub.f32 %v1253, %v1315
  %v1356 = vsub.f32 %v1254, %v1317
  %v1357 = vsub.f32 %v1255, %v1319
  %v1358 = vsub.f32 %v1256, %v1321
  %v1359 = vsub.f32 %v1257, %v1323
  %v1360 = vsub.f32 %v1258, %v1325
  %v1361 = vsub.f32 %v1259, %v1327
  %v1362 = vrcp.pop %v1345
  %v1363 = vmul.f32 1.0, %v1362
  %v1364 = vrcp.pop %v1346
  %v1365 = vmul.f32 1.0, %v1364
  %v1366 = vrcp.pop %v1347
  %v1367 = vmul.f32 1.0, %v1366
  %v1368 = vrcp.pop %v1348
  %v1369 = vmul.f32 1.0, %v1368
  %v1370 = vrcp.pop %v1349
  %v1371 = vmul.f32 1.0, %v1370
  %v1372 = vrcp.pop %v1350
  %v1373 = vmul.f32 1.0, %v1372
  %v1374 = vrcp.pop %v1351
  %v1375 = vmul.f32 1.0, %v1374
  %v1376 = vrcp.pop %v1352
  %v1377 = vmul.f32 1.0, %v1376
  %v1378 = vrcp.pop %v1353
  %v1379 = vmul.f32 1.0, %v1378
  %v1380 = vrcp.pop %v1354
  %v1381 = vmul.f32 1.0, %v1380
  %v1382 = vrcp.pop %v1355
  %v1383 = vmul.f32 1.0, %v1382
  %v1384 = vrcp.pop %v1356
  %v1385 = vmul.f32 1.0, %v1384
  %v1386 = vrcp.pop %v1357
  %v1387 = vmul.f32 1.0, %v1386
  %v1388 = vrcp.pop %v1358
  %v1389 = vmul.f32 1.0, %v1388
  %v1390 = vrcp.pop %v1359
  %v1391 = vmul.f32 1.0, %v1390
  %v1392 = vrcp.pop %v1360
  %v1393 = vmul.f32 1.0, %v1392
  %v1394 = vrcp.pop %v1361
  %v1395 = vmul.f32 1.0, %v1394
  %1413 = vrot.lane.b32.xlu0 %v1363, 1
  %v1414 = vpop.permute.xlu0 %1413
  %1415 = vrot.lane.b32.xlu0 %v1365, 1
  %v1416 = vpop.permute.xlu0 %1415
  %1417 = vrot.lane.b32.xlu0 %v1367, 1
  %v1418 = vpop.permute.xlu0 %1417
  %1419 = vrot.lane.b32.xlu0 %v1369, 1
  %v1420 = vpop.permute.xlu0 %1419
  %1421 = vrot.lane.b32.xlu0 %v1371, 1
  %v1422 = vpop.permute.xlu0 %1421
  %1423 = vrot.lane.b32.xlu0 %v1373, 1
  %v1424 = vpop.permute.xlu0 %1423
  %1425 = vrot.lane.b32.xlu0 %v1375, 1
  %v1426 = vpop.permute.xlu0 %1425
  %1427 = vrot.lane.b32.xlu0 %v1377, 1
  %v1428 = vpop.permute.xlu0 %1427
  %1429 = vrot.lane.b32.xlu0 %v1379, 1
  %v1430 = vpop.permute.xlu0 %1429
  %1431 = vrot.lane.b32.xlu0 %v1381, 1
  %v1432 = vpop.permute.xlu0 %1431
  %1433 = vrot.lane.b32.xlu0 %v1383, 1
  %v1434 = vpop.permute.xlu0 %1433
  %1435 = vrot.lane.b32.xlu0 %v1385, 1
  %v1436 = vpop.permute.xlu0 %1435
  %1437 = vrot.lane.b32.xlu0 %v1387, 1
  %v1438 = vpop.permute.xlu0 %1437
  %1439 = vrot.lane.b32.xlu0 %v1389, 1
  %v1440 = vpop.permute.xlu0 %1439
  %1441 = vrot.lane.b32.xlu0 %v1391, 1
  %v1442 = vpop.permute.xlu0 %1441
  %1443 = vrot.lane.b32.xlu0 %v1393, 1
  %v1444 = vpop.permute.xlu0 %1443
  %1445 = vrot.lane.b32.xlu0 %v1395, 1
  %v1446 = vpop.permute.xlu0 %1445
  %v1464 = vmul.f32 %v1005, %v1414
  %v1465 = vmul.f32 %v1006, %v1416
  %v1466 = vmul.f32 %v1007, %v1418
  %v1467 = vmul.f32 %v1008, %v1420
  %v1468 = vmul.f32 %v1009, %v1422
  %v1469 = vmul.f32 %v1010, %v1424
  %v1470 = vmul.f32 %v1011, %v1426
  %v1471 = vmul.f32 %v1012, %v1428
  %v1472 = vmul.f32 %v1013, %v1430
  %v1473 = vmul.f32 %v1014, %v1432
  %v1474 = vmul.f32 %v1015, %v1434
  %v1475 = vmul.f32 %v1016, %v1436
  %v1476 = vmul.f32 %v1017, %v1438
  %v1477 = vmul.f32 %v1018, %v1440
  %v1478 = vmul.f32 %v1019, %v1442
  %v1479 = vmul.f32 %v1020, %v1444
  %v1480 = vmul.f32 %v1021, %v1446
  %v1481 = vmul.f32 %v1005, %v1363
  %v1482 = vmul.f32 %v1006, %v1365
  %v1483 = vmul.f32 %v1007, %v1367
  %v1484 = vmul.f32 %v1008, %v1369
  %v1485 = vmul.f32 %v1009, %v1371
  %v1486 = vmul.f32 %v1010, %v1373
  %v1487 = vmul.f32 %v1011, %v1375
  %v1488 = vmul.f32 %v1012, %v1377
  %v1489 = vmul.f32 %v1013, %v1379
  %v1490 = vmul.f32 %v1014, %v1381
  %v1491 = vmul.f32 %v1015, %v1383
  %v1492 = vmul.f32 %v1016, %v1385
  %v1493 = vmul.f32 %v1017, %v1387
  %v1494 = vmul.f32 %v1018, %v1389
  %v1495 = vmul.f32 %v1019, %v1391
  %v1496 = vmul.f32 %v1020, %v1393
  %v1497 = vmul.f32 %v1021, %v1395
  %v1498 = vmul.f32 %v1158, -2.0
  %v1499 = vmul.f32 %v1159, -2.0
  %v1500 = vmul.f32 %v1160, -2.0
  %v1501 = vmul.f32 %v1161, -2.0
  %v1502 = vmul.f32 %v1162, -2.0
  %v1503 = vmul.f32 %v1163, -2.0
  %v1504 = vmul.f32 %v1164, -2.0
  %v1505 = vmul.f32 %v1165, -2.0
  %v1506 = vmul.f32 %v1166, -2.0
  %v1507 = vmul.f32 %v1167, -2.0
  %v1508 = vmul.f32 %v1168, -2.0
  %v1509 = vmul.f32 %v1169, -2.0
  %v1510 = vmul.f32 %v1170, -2.0
  %v1511 = vmul.f32 %v1171, -2.0
  %v1512 = vmul.f32 %v1172, -2.0
  %v1513 = vmul.f32 %v1173, -2.0
  %v1514 = vmul.f32 %v1174, -2.0
  %1515 = vrot.lane.b32.xlu0 %v1363, 2
  %v1516 = vpop.permute.xlu0 %1515
  %1517 = vrot.lane.b32.xlu0 %v1365, 2
  %v1518 = vpop.permute.xlu0 %1517
  %1519 = vrot.lane.b32.xlu0 %v1367, 2
  %v1520 = vpop.permute.xlu0 %1519
  %1521 = vrot.lane.b32.xlu0 %v1369, 2
  %v1522 = vpop.permute.xlu0 %1521
  %1523 = vrot.lane.b32.xlu0 %v1371, 2
  %v1524 = vpop.permute.xlu0 %1523
  %1525 = vrot.lane.b32.xlu0 %v1373, 2
  %v1526 = vpop.permute.xlu0 %1525
  %1527 = vrot.lane.b32.xlu0 %v1375, 2
  %v1528 = vpop.permute.xlu0 %1527
  %1529 = vrot.lane.b32.xlu0 %v1377, 2
  %v1530 = vpop.permute.xlu0 %1529
  %1531 = vrot.lane.b32.xlu0 %v1379, 2
  %v1532 = vpop.permute.xlu0 %1531
  %1533 = vrot.lane.b32.xlu0 %v1381, 2
  %v1534 = vpop.permute.xlu0 %1533
  %1535 = vrot.lane.b32.xlu0 %v1383, 2
  %v1536 = vpop.permute.xlu0 %1535
  %1537 = vrot.lane.b32.xlu0 %v1385, 2
  %v1538 = vpop.permute.xlu0 %1537
  %1539 = vrot.lane.b32.xlu0 %v1387, 2
  %v1540 = vpop.permute.xlu0 %1539
  %1541 = vrot.lane.b32.xlu0 %v1389, 2
  %v1542 = vpop.permute.xlu0 %1541
  %1543 = vrot.lane.b32.xlu0 %v1391, 2
  %v1544 = vpop.permute.xlu0 %1543
  %1545 = vrot.lane.b32.xlu0 %v1393, 2
  %v1546 = vpop.permute.xlu0 %1545
  %1547 = vrot.lane.b32.xlu0 %v1395, 2
  %v1548 = vpop.permute.xlu0 %1547
  %v1566 = vmul.f32 %v1498, %v1516
  %v1567 = vmul.f32 %v1499, %v1518
  %v1568 = vmul.f32 %v1500, %v1520
  %v1569 = vmul.f32 %v1501, %v1522
  %v1570 = vmul.f32 %v1502, %v1524
  %v1571 = vmul.f32 %v1503, %v1526
  %v1572 = vmul.f32 %v1504, %v1528
  %v1573 = vmul.f32 %v1505, %v1530
  %v1574 = vmul.f32 %v1506, %v1532
  %v1575 = vmul.f32 %v1507, %v1534
  %v1576 = vmul.f32 %v1508, %v1536
  %v1577 = vmul.f32 %v1509, %v1538
  %v1578 = vmul.f32 %v1510, %v1540
  %v1579 = vmul.f32 %v1511, %v1542
  %v1580 = vmul.f32 %v1512, %v1544
  %v1581 = vmul.f32 %v1513, %v1546
  %v1582 = vmul.f32 %v1514, %v1548
  %v1583 = vld [vmem:[%s5] sm:$0xf]
  %v1584 = vld [vmem:[%s5 + $0x4] sm:$0xf]
  %v1585 = vld [vmem:[%s5 + $0x8] sm:$0xf]
  %v1586 = vld [vmem:[%s5 + $0xc] sm:$0xf]
  %v1587 = vld [vmem:[%s5 + $0x10] sm:$0xf]
  %v1588 = vld [vmem:[%s5 + $0x14] sm:$0xf]
  %v1589 = vld [vmem:[%s5 + $0x18] sm:$0xf]
  %v1590 = vld [vmem:[%s5 + $0x1c] sm:$0xf]
  %v1591 = vld [vmem:[%s5 + $0x20] sm:$0xf]
  %v1592 = vld [vmem:[%s5 + $0x24] sm:$0xf]
  %v1593 = vld [vmem:[%s5 + $0x28] sm:$0xf]
  %v1594 = vld [vmem:[%s5 + $0x2c] sm:$0xf]
  %v1595 = vld [vmem:[%s5 + $0x30] sm:$0xf]
  %v1596 = vld [vmem:[%s5 + $0x34] sm:$0xf]
  %v1597 = vld [vmem:[%s5 + $0x38] sm:$0xf]
  %v1598 = vld [vmem:[%s5 + $0x3c] sm:$0xf]
  %v1599 = vld [vmem:[%s5 + $0x40] sm:$0xf]
  %v1600 = vunpack.c.l.bf16 %v1583
  %v1601 = vunpack.c.l.bf16 %v1584
  %v1602 = vunpack.c.l.bf16 %v1585
  %v1603 = vunpack.c.l.bf16 %v1586
  %v1604 = vunpack.c.l.bf16 %v1587
  %v1605 = vunpack.c.l.bf16 %v1588
  %v1606 = vunpack.c.l.bf16 %v1589
  %v1607 = vunpack.c.l.bf16 %v1590
  %v1608 = vunpack.c.l.bf16 %v1591
  %v1609 = vunpack.c.l.bf16 %v1592
  %v1610 = vunpack.c.l.bf16 %v1593
  %v1611 = vunpack.c.l.bf16 %v1594
  %v1612 = vunpack.c.l.bf16 %v1595
  %v1613 = vunpack.c.l.bf16 %v1596
  %v1614 = vunpack.c.l.bf16 %v1597
  %v1615 = vunpack.c.l.bf16 %v1598
  %v1616 = vunpack.c.l.bf16 %v1599
  %v1617 = vld [vmem:[%s6] sm:$0xf]
  %v1618 = vld [vmem:[%s6 + $0x4] sm:$0xf]
  %v1619 = vld [vmem:[%s6 + $0x8] sm:$0xf]
  %v1620 = vld [vmem:[%s6 + $0xc] sm:$0xf]
  %v1621 = vld [vmem:[%s6 + $0x10] sm:$0xf]
  %v1622 = vld [vmem:[%s6 + $0x14] sm:$0xf]
  %v1623 = vld [vmem:[%s6 + $0x18] sm:$0xf]
  %v1624 = vld [vmem:[%s6 + $0x1c] sm:$0xf]
  %v1625 = vld [vmem:[%s6 + $0x20] sm:$0xf]
  %v1626 = vld [vmem:[%s6 + $0x24] sm:$0xf]
  %v1627 = vld [vmem:[%s6 + $0x28] sm:$0xf]
  %v1628 = vld [vmem:[%s6 + $0x2c] sm:$0xf]
  %v1629 = vld [vmem:[%s6 + $0x30] sm:$0xf]
  %v1630 = vld [vmem:[%s6 + $0x34] sm:$0xf]
  %v1631 = vld [vmem:[%s6 + $0x38] sm:$0xf]
  %v1632 = vld [vmem:[%s6 + $0x3c] sm:$0xf]
  %v1633 = vld [vmem:[%s6 + $0x40] sm:$0xf]
  %v1634 = vunpack.c.l.bf16 %v1617
  %v1635 = vunpack.c.l.bf16 %v1618
  %v1636 = vunpack.c.l.bf16 %v1619
  %v1637 = vunpack.c.l.bf16 %v1620
  %v1638 = vunpack.c.l.bf16 %v1621
  %v1639 = vunpack.c.l.bf16 %v1622
  %v1640 = vunpack.c.l.bf16 %v1623
  %v1641 = vunpack.c.l.bf16 %v1624
  %v1642 = vunpack.c.l.bf16 %v1625
  %v1643 = vunpack.c.l.bf16 %v1626
  %v1644 = vunpack.c.l.bf16 %v1627
  %v1645 = vunpack.c.l.bf16 %v1628
  %v1646 = vunpack.c.l.bf16 %v1629
  %v1647 = vunpack.c.l.bf16 %v1630
  %v1648 = vunpack.c.l.bf16 %v1631
  %v1649 = vunpack.c.l.bf16 %v1632
  %v1650 = vunpack.c.l.bf16 %v1633
  %v1651 = vld [vmem:[%s7] sm:$0xf]
  %v1652 = vld [vmem:[%s7 + $0x4] sm:$0xf]
  %v1653 = vld [vmem:[%s7 + $0x8] sm:$0xf]
  %v1654 = vld [vmem:[%s7 + $0xc] sm:$0xf]
  %v1655 = vld [vmem:[%s7 + $0x10] sm:$0xf]
  %v1656 = vld [vmem:[%s7 + $0x14] sm:$0xf]
  %v1657 = vld [vmem:[%s7 + $0x18] sm:$0xf]
  %v1658 = vld [vmem:[%s7 + $0x1c] sm:$0xf]
  %v1659 = vld [vmem:[%s7 + $0x20] sm:$0xf]
  %v1660 = vld [vmem:[%s7 + $0x24] sm:$0xf]
  %v1661 = vld [vmem:[%s7 + $0x28] sm:$0xf]
  %v1662 = vld [vmem:[%s7 + $0x2c] sm:$0xf]
  %v1663 = vld [vmem:[%s7 + $0x30] sm:$0xf]
  %v1664 = vld [vmem:[%s7 + $0x34] sm:$0xf]
  %v1665 = vld [vmem:[%s7 + $0x38] sm:$0xf]
  %v1666 = vld [vmem:[%s7 + $0x3c] sm:$0xf]
  %v1667 = vld [vmem:[%s7 + $0x40] sm:$0xf]
  %v1668 = vunpack.c.l.bf16 %v1651
  %v1669 = vunpack.c.l.bf16 %v1652
  %v1670 = vunpack.c.l.bf16 %v1653
  %v1671 = vunpack.c.l.bf16 %v1654
  %v1672 = vunpack.c.l.bf16 %v1655
  %v1673 = vunpack.c.l.bf16 %v1656
  %v1674 = vunpack.c.l.bf16 %v1657
  %v1675 = vunpack.c.l.bf16 %v1658
  %v1676 = vunpack.c.l.bf16 %v1659
  %v1677 = vunpack.c.l.bf16 %v1660
  %v1678 = vunpack.c.l.bf16 %v1661
  %v1679 = vunpack.c.l.bf16 %v1662
  %v1680 = vunpack.c.l.bf16 %v1663
  %v1681 = vunpack.c.l.bf16 %v1664
  %v1682 = vunpack.c.l.bf16 %v1665
  %v1683 = vunpack.c.l.bf16 %v1666
  %v1684 = vunpack.c.l.bf16 %v1667
  %1686 = vset.pattern.permute.xlu0 1
  %1687 = vperm.xlu0 %1686, %v1464
  %v1688 = vpop.permute.xlu0 %1687
  %1691 = vset.pattern.permute.xlu0 1
  %1692 = vperm.xlu0 %1691, %v1465
  %v1693 = vpop.permute.xlu0 %1692
  %1696 = vset.pattern.permute.xlu0 1
  %1697 = vperm.xlu0 %1696, %v1466
  %v1698 = vpop.permute.xlu0 %1697
  %1701 = vset.pattern.permute.xlu0 1
  %1702 = vperm.xlu0 %1701, %v1467
  %v1703 = vpop.permute.xlu0 %1702
  %1706 = vset.pattern.permute.xlu0 1
  %1707 = vperm.xlu0 %1706, %v1468
  %v1708 = vpop.permute.xlu0 %1707
  %1711 = vset.pattern.permute.xlu0 1
  %1712 = vperm.xlu0 %1711, %v1469
  %v1713 = vpop.permute.xlu0 %1712
  %1716 = vset.pattern.permute.xlu0 1
  %1717 = vperm.xlu0 %1716, %v1470
  %v1718 = vpop.permute.xlu0 %1717
  %1721 = vset.pattern.permute.xlu0 1
  %1722 = vperm.xlu0 %1721, %v1471
  %v1723 = vpop.permute.xlu0 %1722
  %1726 = vset.pattern.permute.xlu0 1
  %1727 = vperm.xlu0 %1726, %v1472
  %v1728 = vpop.permute.xlu0 %1727
  %1731 = vset.pattern.permute.xlu0 1
  %1732 = vperm.xlu0 %1731, %v1473
  %v1733 = vpop.permute.xlu0 %1732
  %1736 = vset.pattern.permute.xlu0 1
  %1737 = vperm.xlu0 %1736, %v1474
  %v1738 = vpop.permute.xlu0 %1737
  %1741 = vset.pattern.permute.xlu0 1
  %1742 = vperm.xlu0 %1741, %v1475
  %v1743 = vpop.permute.xlu0 %1742
  %1746 = vset.pattern.permute.xlu0 1
  %1747 = vperm.xlu0 %1746, %v1476
  %v1748 = vpop.permute.xlu0 %1747
  %1751 = vset.pattern.permute.xlu0 1
  %1752 = vperm.xlu0 %1751, %v1477
  %v1753 = vpop.permute.xlu0 %1752
  %1756 = vset.pattern.permute.xlu0 1
  %1757 = vperm.xlu0 %1756, %v1478
  %v1758 = vpop.permute.xlu0 %1757
  %1761 = vset.pattern.permute.xlu0 1
  %1762 = vperm.xlu0 %1761, %v1479
  %v1763 = vpop.permute.xlu0 %1762
  %1766 = vset.pattern.permute.xlu0 1
  %1767 = vperm.xlu0 %1766, %v1480
  %v1768 = vpop.permute.xlu0 %1767
  %v1770 = vmul.f32 %v1688, %v1600
  %v1771 = vmul.f32 %v1693, %v1601
  %v1772 = vmul.f32 %v1698, %v1602
  %v1773 = vmul.f32 %v1703, %v1603
  %v1774 = vmul.f32 %v1708, %v1604
  %v1775 = vmul.f32 %v1713, %v1605
  %v1776 = vmul.f32 %v1718, %v1606
  %v1777 = vmul.f32 %v1723, %v1607
  %v1778 = vmul.f32 %v1728, %v1608
  %v1779 = vmul.f32 %v1733, %v1609
  %v1780 = vmul.f32 %v1738, %v1610
  %v1781 = vmul.f32 %v1743, %v1611
  %v1782 = vmul.f32 %v1748, %v1612
  %v1783 = vmul.f32 %v1753, %v1613
  %v1784 = vmul.f32 %v1758, %v1614
  %v1785 = vmul.f32 %v1763, %v1615
  %v1786 = vmul.f32 %v1768, %v1616
  %1788 = vset.pattern.permute.xlu0 2
  %1789 = vperm.xlu0 %1788, %v1566
  %v1790 = vpop.permute.xlu0 %1789
  %1793 = vset.pattern.permute.xlu0 2
  %1794 = vperm.xlu0 %1793, %v1567
  %v1795 = vpop.permute.xlu0 %1794
  %1798 = vset.pattern.permute.xlu0 2
  %1799 = vperm.xlu0 %1798, %v1568
  %v1800 = vpop.permute.xlu0 %1799
  %1803 = vset.pattern.permute.xlu0 2
  %1804 = vperm.xlu0 %1803, %v1569
  %v1805 = vpop.permute.xlu0 %1804
  %1808 = vset.pattern.permute.xlu0 2
  %1809 = vperm.xlu0 %1808, %v1570
  %v1810 = vpop.permute.xlu0 %1809
  %1813 = vset.pattern.permute.xlu0 2
  %1814 = vperm.xlu0 %1813, %v1571
  %v1815 = vpop.permute.xlu0 %1814
  %1818 = vset.pattern.permute.xlu0 2
  %1819 = vperm.xlu0 %1818, %v1572
  %v1820 = vpop.permute.xlu0 %1819
  %1823 = vset.pattern.permute.xlu0 2
  %1824 = vperm.xlu0 %1823, %v1573
  %v1825 = vpop.permute.xlu0 %1824
  %1828 = vset.pattern.permute.xlu0 2
  %1829 = vperm.xlu0 %1828, %v1574
  %v1830 = vpop.permute.xlu0 %1829
  %1833 = vset.pattern.permute.xlu0 2
  %1834 = vperm.xlu0 %1833, %v1575
  %v1835 = vpop.permute.xlu0 %1834
  %1838 = vset.pattern.permute.xlu0 2
  %1839 = vperm.xlu0 %1838, %v1576
  %v1840 = vpop.permute.xlu0 %1839
  %1843 = vset.pattern.permute.xlu0 2
  %1844 = vperm.xlu0 %1843, %v1577
  %v1845 = vpop.permute.xlu0 %1844
  %1848 = vset.pattern.permute.xlu0 2
  %1849 = vperm.xlu0 %1848, %v1578
  %v1850 = vpop.permute.xlu0 %1849
  %1853 = vset.pattern.permute.xlu0 2
  %1854 = vperm.xlu0 %1853, %v1579
  %v1855 = vpop.permute.xlu0 %1854
  %1858 = vset.pattern.permute.xlu0 2
  %1859 = vperm.xlu0 %1858, %v1580
  %v1860 = vpop.permute.xlu0 %1859
  %1863 = vset.pattern.permute.xlu0 2
  %1864 = vperm.xlu0 %1863, %v1581
  %v1865 = vpop.permute.xlu0 %1864
  %1868 = vset.pattern.permute.xlu0 2
  %1869 = vperm.xlu0 %1868, %v1582
  %v1870 = vpop.permute.xlu0 %1869
  %v1872 = vmul.f32 %v1790, %v1634
  %v1873 = vmul.f32 %v1795, %v1635
  %v1874 = vmul.f32 %v1800, %v1636
  %v1875 = vmul.f32 %v1805, %v1637
  %v1876 = vmul.f32 %v1810, %v1638
  %v1877 = vmul.f32 %v1815, %v1639
  %v1878 = vmul.f32 %v1820, %v1640
  %v1879 = vmul.f32 %v1825, %v1641
  %v1880 = vmul.f32 %v1830, %v1642
  %v1881 = vmul.f32 %v1835, %v1643
  %v1882 = vmul.f32 %v1840, %v1644
  %v1883 = vmul.f32 %v1845, %v1645
  %v1884 = vmul.f32 %v1850, %v1646
  %v1885 = vmul.f32 %v1855, %v1647
  %v1886 = vmul.f32 %v1860, %v1648
  %v1887 = vmul.f32 %v1865, %v1649
  %v1888 = vmul.f32 %v1870, %v1650
  %v1889 = vadd.f32 %v1770, %v1872
  %v1890 = vadd.f32 %v1771, %v1873
  %v1891 = vadd.f32 %v1772, %v1874
  %v1892 = vadd.f32 %v1773, %v1875
  %v1893 = vadd.f32 %v1774, %v1876
  %v1894 = vadd.f32 %v1775, %v1877
  %v1895 = vadd.f32 %v1776, %v1878
  %v1896 = vadd.f32 %v1777, %v1879
  %v1897 = vadd.f32 %v1778, %v1880
  %v1898 = vadd.f32 %v1779, %v1881
  %v1899 = vadd.f32 %v1780, %v1882
  %v1900 = vadd.f32 %v1781, %v1883
  %v1901 = vadd.f32 %v1782, %v1884
  %v1902 = vadd.f32 %v1783, %v1885
  %v1903 = vadd.f32 %v1784, %v1886
  %v1904 = vadd.f32 %v1785, %v1887
  %v1905 = vadd.f32 %v1786, %v1888
  %1907 = vset.pattern.permute.xlu0 0
  %1908 = vperm.xlu0 %1907, %v1481
  %v1909 = vpop.permute.xlu0 %1908
  %1912 = vset.pattern.permute.xlu0 0
  %1913 = vperm.xlu0 %1912, %v1482
  %v1914 = vpop.permute.xlu0 %1913
  %1917 = vset.pattern.permute.xlu0 0
  %1918 = vperm.xlu0 %1917, %v1483
  %v1919 = vpop.permute.xlu0 %1918
  %1922 = vset.pattern.permute.xlu0 0
  %1923 = vperm.xlu0 %1922, %v1484
  %v1924 = vpop.permute.xlu0 %1923
  %1927 = vset.pattern.permute.xlu0 0
  %1928 = vperm.xlu0 %1927, %v1485
  %v1929 = vpop.permute.xlu0 %1928
  %1932 = vset.pattern.permute.xlu0 0
  %1933 = vperm.xlu0 %1932, %v1486
  %v1934 = vpop.permute.xlu0 %1933
  %1937 = vset.pattern.permute.xlu0 0
  %1938 = vperm.xlu0 %1937, %v1487
  %v1939 = vpop.permute.xlu0 %1938
  %1942 = vset.pattern.permute.xlu0 0
  %1943 = vperm.xlu0 %1942, %v1488
  %v1944 = vpop.permute.xlu0 %1943
  %1947 = vset.pattern.permute.xlu0 0
  %1948 = vperm.xlu0 %1947, %v1489
  %v1949 = vpop.permute.xlu0 %1948
  %1952 = vset.pattern.permute.xlu0 0
  %1953 = vperm.xlu0 %1952, %v1490
  %v1954 = vpop.permute.xlu0 %1953
  %1957 = vset.pattern.permute.xlu0 0
  %1958 = vperm.xlu0 %1957, %v1491
  %v1959 = vpop.permute.xlu0 %1958
  %1962 = vset.pattern.permute.xlu0 0
  %1963 = vperm.xlu0 %1962, %v1492
  %v1964 = vpop.permute.xlu0 %1963
  %1967 = vset.pattern.permute.xlu0 0
  %1968 = vperm.xlu0 %1967, %v1493
  %v1969 = vpop.permute.xlu0 %1968
  %1972 = vset.pattern.permute.xlu0 0
  %1973 = vperm.xlu0 %1972, %v1494
  %v1974 = vpop.permute.xlu0 %1973
  %1977 = vset.pattern.permute.xlu0 0
  %1978 = vperm.xlu0 %1977, %v1495
  %v1979 = vpop.permute.xlu0 %1978
  %1982 = vset.pattern.permute.xlu0 0
  %1983 = vperm.xlu0 %1982, %v1496
  %v1984 = vpop.permute.xlu0 %1983
  %1987 = vset.pattern.permute.xlu0 0
  %1988 = vperm.xlu0 %1987, %v1497
  %v1989 = vpop.permute.xlu0 %1988
  %v1991 = vmul.f32 %v1909, %v1668
  %v1992 = vmul.f32 %v1914, %v1669
  %v1993 = vmul.f32 %v1919, %v1670
  %v1994 = vmul.f32 %v1924, %v1671
  %v1995 = vmul.f32 %v1929, %v1672
  %v1996 = vmul.f32 %v1934, %v1673
  %v1997 = vmul.f32 %v1939, %v1674
  %v1998 = vmul.f32 %v1944, %v1675
  %v1999 = vmul.f32 %v1949, %v1676
  %v2000 = vmul.f32 %v1954, %v1677
  %v2001 = vmul.f32 %v1959, %v1678
  %v2002 = vmul.f32 %v1964, %v1679
  %v2003 = vmul.f32 %v1969, %v1680
  %v2004 = vmul.f32 %v1974, %v1681
  %v2005 = vmul.f32 %v1979, %v1682
  %v2006 = vmul.f32 %v1984, %v1683
  %v2007 = vmul.f32 %v1989, %v1684
  %v2008 = vadd.f32 %v1889, %v1991
  %v2009 = vadd.f32 %v1890, %v1992
  %v2010 = vadd.f32 %v1891, %v1993
  %v2011 = vadd.f32 %v1892, %v1994
  %v2012 = vadd.f32 %v1893, %v1995
  %v2013 = vadd.f32 %v1894, %v1996
  %v2014 = vadd.f32 %v1895, %v1997
  %v2015 = vadd.f32 %v1896, %v1998
  %v2016 = vadd.f32 %v1897, %v1999
  %v2017 = vadd.f32 %v1898, %v2000
  %v2018 = vadd.f32 %v1899, %v2001
  %v2019 = vadd.f32 %v1900, %v2002
  %v2020 = vadd.f32 %v1901, %v2003
  %v2021 = vadd.f32 %v1902, %v2004
  %v2022 = vadd.f32 %v1903, %v2005
  %v2023 = vadd.f32 %v1904, %v2006
  %v2024 = vadd.f32 %v1905, %v2007
  %v2025 = vmul.f32 %v2008, -0.5
  %v2026 = vmul.f32 %v2009, -0.5
  %v2027 = vmul.f32 %v2010, -0.5
  %v2028 = vmul.f32 %v2011, -0.5
  %v2029 = vmul.f32 %v2012, -0.5
  %v2030 = vmul.f32 %v2013, -0.5
  %v2031 = vmul.f32 %v2014, -0.5
  %v2032 = vmul.f32 %v2015, -0.5
  %v2033 = vmul.f32 %v2016, -0.5
  %v2034 = vmul.f32 %v2017, -0.5
  %v2035 = vmul.f32 %v2018, -0.5
  %v2036 = vmul.f32 %v2019, -0.5
  %v2037 = vmul.f32 %v2020, -0.5
  %v2038 = vmul.f32 %v2021, -0.5
  %v2039 = vmul.f32 %v2022, -0.5
  %v2040 = vmul.f32 %v2023, -0.5
  %v2041 = vmul.f32 %v2024, -0.5
  %v2042 = vmul.f32 %v2025, 1.442695
  %v2043 = vpow.pop %v2042
  %v2044 = vmul.f32 %v2026, 1.442695
  %v2045 = vpow.pop %v2044
  %v2046 = vmul.f32 %v2027, 1.442695
  %v2047 = vpow.pop %v2046
  %v2048 = vmul.f32 %v2028, 1.442695
  %v2049 = vpow.pop %v2048
  %v2050 = vmul.f32 %v2029, 1.442695
  %v2051 = vpow.pop %v2050
  %v2052 = vmul.f32 %v2030, 1.442695
  %v2053 = vpow.pop %v2052
  %v2054 = vmul.f32 %v2031, 1.442695
  %v2055 = vpow.pop %v2054
  %v2056 = vmul.f32 %v2032, 1.442695
  %v2057 = vpow.pop %v2056
  %v2058 = vmul.f32 %v2033, 1.442695
  %v2059 = vpow.pop %v2058
  %v2060 = vmul.f32 %v2034, 1.442695
  %v2061 = vpow.pop %v2060
  %v2062 = vmul.f32 %v2035, 1.442695
  %v2063 = vpow.pop %v2062
  %v2064 = vmul.f32 %v2036, 1.442695
  %v2065 = vpow.pop %v2064
  %v2066 = vmul.f32 %v2037, 1.442695
  %v2067 = vpow.pop %v2066
  %v2068 = vmul.f32 %v2038, 1.442695
  %v2069 = vpow.pop %v2068
  %v2070 = vmul.f32 %v2039, 1.442695
  %v2071 = vpow.pop %v2070
  %v2072 = vmul.f32 %v2040, 1.442695
  %v2073 = vpow.pop %v2072
  %v2074 = vmul.f32 %v2041, 1.442695
  %v2075 = vpow.pop %v2074
  %v2076 = vmax.f32 %v2043, 0.0009765625
  %v2077 = vmax.f32 %v2045, 0.0009765625
  %v2078 = vmax.f32 %v2047, 0.0009765625
  %v2079 = vmax.f32 %v2049, 0.0009765625
  %v2080 = vmax.f32 %v2051, 0.0009765625
  %v2081 = vmax.f32 %v2053, 0.0009765625
  %v2082 = vmax.f32 %v2055, 0.0009765625
  %v2083 = vmax.f32 %v2057, 0.0009765625
  %v2084 = vmax.f32 %v2059, 0.0009765625
  %v2085 = vmax.f32 %v2061, 0.0009765625
  %v2086 = vmax.f32 %v2063, 0.0009765625
  %v2087 = vmax.f32 %v2065, 0.0009765625
  %v2088 = vmax.f32 %v2067, 0.0009765625
  %v2089 = vmax.f32 %v2069, 0.0009765625
  %v2090 = vmax.f32 %v2071, 0.0009765625
  %v2091 = vmax.f32 %v2073, 0.0009765625
  %v2092 = vmax.f32 %v2075, 0.0009765625
  %v2093 = vmin.f32 %v2076, 0.99902344
  %v2094 = vmin.f32 %v2077, 0.99902344
  %v2095 = vmin.f32 %v2078, 0.99902344
  %v2096 = vmin.f32 %v2079, 0.99902344
  %v2097 = vmin.f32 %v2080, 0.99902344
  %v2098 = vmin.f32 %v2081, 0.99902344
  %v2099 = vmin.f32 %v2082, 0.99902344
  %v2100 = vmin.f32 %v2083, 0.99902344
  %v2101 = vmin.f32 %v2084, 0.99902344
  %v2102 = vmin.f32 %v2085, 0.99902344
  %v2103 = vmin.f32 %v2086, 0.99902344
  %v2104 = vmin.f32 %v2087, 0.99902344
  %v2105 = vmin.f32 %v2088, 0.99902344
  %v2106 = vmin.f32 %v2089, 0.99902344
  %v2107 = vmin.f32 %v2090, 0.99902344
  %v2108 = vmin.f32 %v2091, 0.99902344
  %v2109 = vmin.f32 %v2092, 0.99902344
  %v2110 = vld [vmem:[%s8] sm:$0xff]
  %v2111 = vld [vmem:[%s8 + $0x8] sm:$0xff]
  %v2112 = vld [vmem:[%s8 + $0x10] sm:$0xff]
  %v2113 = vld [vmem:[%s8 + $0x18] sm:$0xff]
  %v2114 = vld [vmem:[%s8 + $0x20] sm:$0xff]
  %v2115 = vld [vmem:[%s8 + $0x28] sm:$0xff]
  %v2116 = vld [vmem:[%s8 + $0x30] sm:$0xff]
  %v2117 = vld [vmem:[%s8 + $0x38] sm:$0xff]
  %v2118 = vld [vmem:[%s8 + $0x40] sm:$0xff]
  %v2119 = vld [vmem:[%s8 + $0x48] sm:$0xff]
  %v2120 = vld [vmem:[%s8 + $0x50] sm:$0xff]
  %v2121 = vld [vmem:[%s8 + $0x58] sm:$0xff]
  %v2122 = vld [vmem:[%s8 + $0x60] sm:$0xff]
  %v2123 = vld [vmem:[%s8 + $0x68] sm:$0xff]
  %v2124 = vld [vmem:[%s8 + $0x70] sm:$0xff]
  %v2125 = vld [vmem:[%s8 + $0x78] sm:$0xff]
  %v2126 = vld [vmem:[%s8 + $0x80] sm:$0xff]
  %v2127 = vmax.f32 %v2110, 0.0009765625
  %v2128 = vmax.f32 %v2111, 0.0009765625
  %v2129 = vmax.f32 %v2112, 0.0009765625
  %v2130 = vmax.f32 %v2113, 0.0009765625
  %v2131 = vmax.f32 %v2114, 0.0009765625
  %v2132 = vmax.f32 %v2115, 0.0009765625
  %v2133 = vmax.f32 %v2116, 0.0009765625
  %v2134 = vmax.f32 %v2117, 0.0009765625
  %v2135 = vmax.f32 %v2118, 0.0009765625
  %v2136 = vmax.f32 %v2119, 0.0009765625
  %v2137 = vmax.f32 %v2120, 0.0009765625
  %v2138 = vmax.f32 %v2121, 0.0009765625
  %v2139 = vmax.f32 %v2122, 0.0009765625
  %v2140 = vmax.f32 %v2123, 0.0009765625
  %v2141 = vmax.f32 %v2124, 0.0009765625
  %v2142 = vmax.f32 %v2125, 0.0009765625
  %v2143 = vmax.f32 %v2126, 0.0009765625
  %v2144 = vmin.f32 %v2127, 0.99902344
  %v2145 = vmin.f32 %v2128, 0.99902344
  %v2146 = vmin.f32 %v2129, 0.99902344
  %v2147 = vmin.f32 %v2130, 0.99902344
  %v2148 = vmin.f32 %v2131, 0.99902344
  %v2149 = vmin.f32 %v2132, 0.99902344
  %v2150 = vmin.f32 %v2133, 0.99902344
  %v2151 = vmin.f32 %v2134, 0.99902344
  %v2152 = vmin.f32 %v2135, 0.99902344
  %v2153 = vmin.f32 %v2136, 0.99902344
  %v2154 = vmin.f32 %v2137, 0.99902344
  %v2155 = vmin.f32 %v2138, 0.99902344
  %v2156 = vmin.f32 %v2139, 0.99902344
  %v2157 = vmin.f32 %v2140, 0.99902344
  %v2158 = vmin.f32 %v2141, 0.99902344
  %v2159 = vmin.f32 %v2142, 0.99902344
  %v2160 = vmin.f32 %v2143, 0.99902344
  %v2161 = vmul.f32 %v2093, %v2144
  %v2162 = vmul.f32 %v2094, %v2145
  %v2163 = vmul.f32 %v2095, %v2146
  %v2164 = vmul.f32 %v2096, %v2147
  %v2165 = vmul.f32 %v2097, %v2148
  %v2166 = vmul.f32 %v2098, %v2149
  %v2167 = vmul.f32 %v2099, %v2150
  %v2168 = vmul.f32 %v2100, %v2151
  %v2169 = vmul.f32 %v2101, %v2152
  %v2170 = vmul.f32 %v2102, %v2153
  %v2171 = vmul.f32 %v2103, %v2154
  %v2172 = vmul.f32 %v2104, %v2155
  %v2173 = vmul.f32 %v2105, %v2156
  %v2174 = vmul.f32 %v2106, %v2157
  %v2175 = vmul.f32 %v2107, %v2158
  %v2176 = vmul.f32 %v2108, %v2159
  %v2177 = vmul.f32 %v2109, %v2160
  %v2178 = vsub.f32 1.0, %v2093
  %v2179 = vsub.f32 1.0, %v2094
  %v2180 = vsub.f32 1.0, %v2095
  %v2181 = vsub.f32 1.0, %v2096
  %v2182 = vsub.f32 1.0, %v2097
  %v2183 = vsub.f32 1.0, %v2098
  %v2184 = vsub.f32 1.0, %v2099
  %v2185 = vsub.f32 1.0, %v2100
  %v2186 = vsub.f32 1.0, %v2101
  %v2187 = vsub.f32 1.0, %v2102
  %v2188 = vsub.f32 1.0, %v2103
  %v2189 = vsub.f32 1.0, %v2104
  %v2190 = vsub.f32 1.0, %v2105
  %v2191 = vsub.f32 1.0, %v2106
  %v2192 = vsub.f32 1.0, %v2107
  %v2193 = vsub.f32 1.0, %v2108
  %v2194 = vsub.f32 1.0, %v2109
  %v2195 = vsub.f32 1.0, %v2144
  %v2196 = vsub.f32 1.0, %v2145
  %v2197 = vsub.f32 1.0, %v2146
  %v2198 = vsub.f32 1.0, %v2147
  %v2199 = vsub.f32 1.0, %v2148
  %v2200 = vsub.f32 1.0, %v2149
  %v2201 = vsub.f32 1.0, %v2150
  %v2202 = vsub.f32 1.0, %v2151
  %v2203 = vsub.f32 1.0, %v2152
  %v2204 = vsub.f32 1.0, %v2153
  %v2205 = vsub.f32 1.0, %v2154
  %v2206 = vsub.f32 1.0, %v2155
  %v2207 = vsub.f32 1.0, %v2156
  %v2208 = vsub.f32 1.0, %v2157
  %v2209 = vsub.f32 1.0, %v2158
  %v2210 = vsub.f32 1.0, %v2159
  %v2211 = vsub.f32 1.0, %v2160
  %v2212 = vmul.f32 %v2178, %v2195
  %v2213 = vmul.f32 %v2179, %v2196
  %v2214 = vmul.f32 %v2180, %v2197
  %v2215 = vmul.f32 %v2181, %v2198
  %v2216 = vmul.f32 %v2182, %v2199
  %v2217 = vmul.f32 %v2183, %v2200
  %v2218 = vmul.f32 %v2184, %v2201
  %v2219 = vmul.f32 %v2185, %v2202
  %v2220 = vmul.f32 %v2186, %v2203
  %v2221 = vmul.f32 %v2187, %v2204
  %v2222 = vmul.f32 %v2188, %v2205
  %v2223 = vmul.f32 %v2189, %v2206
  %v2224 = vmul.f32 %v2190, %v2207
  %v2225 = vmul.f32 %v2191, %v2208
  %v2226 = vmul.f32 %v2192, %v2209
  %v2227 = vmul.f32 %v2193, %v2210
  %v2228 = vmul.f32 %v2194, %v2211
  %v2229 = vrcp.pop %v2212
  %v2230 = vmul.f32 %v2161, %v2229
  %v2231 = vrcp.pop %v2213
  %v2232 = vmul.f32 %v2162, %v2231
  %v2233 = vrcp.pop %v2214
  %v2234 = vmul.f32 %v2163, %v2233
  %v2235 = vrcp.pop %v2215
  %v2236 = vmul.f32 %v2164, %v2235
  %v2237 = vrcp.pop %v2216
  %v2238 = vmul.f32 %v2165, %v2237
  %v2239 = vrcp.pop %v2217
  %v2240 = vmul.f32 %v2166, %v2239
  %v2241 = vrcp.pop %v2218
  %v2242 = vmul.f32 %v2167, %v2241
  %v2243 = vrcp.pop %v2219
  %v2244 = vmul.f32 %v2168, %v2243
  %v2245 = vrcp.pop %v2220
  %v2246 = vmul.f32 %v2169, %v2245
  %v2247 = vrcp.pop %v2221
  %v2248 = vmul.f32 %v2170, %v2247
  %v2249 = vrcp.pop %v2222
  %v2250 = vmul.f32 %v2171, %v2249
  %v2251 = vrcp.pop %v2223
  %v2252 = vmul.f32 %v2172, %v2251
  %v2253 = vrcp.pop %v2224
  %v2254 = vmul.f32 %v2173, %v2253
  %v2255 = vrcp.pop %v2225
  %v2256 = vmul.f32 %v2174, %v2255
  %v2257 = vrcp.pop %v2226
  %v2258 = vmul.f32 %v2175, %v2257
  %v2259 = vrcp.pop %v2227
  %v2260 = vmul.f32 %v2176, %v2259
  %v2261 = vrcp.pop %v2228
  %v2262 = vmul.f32 %v2177, %v2261
  %v2263 = vlog2.pop %v2230
  %v2264 = vmul.f32 %v2263, 0.6931472
  %v2265 = vlog2.pop %v2232
  %v2266 = vmul.f32 %v2265, 0.6931472
  %v2267 = vlog2.pop %v2234
  %v2268 = vmul.f32 %v2267, 0.6931472
  %v2269 = vlog2.pop %v2236
  %v2270 = vmul.f32 %v2269, 0.6931472
  %v2271 = vlog2.pop %v2238
  %v2272 = vmul.f32 %v2271, 0.6931472
  %v2273 = vlog2.pop %v2240
  %v2274 = vmul.f32 %v2273, 0.6931472
  %v2275 = vlog2.pop %v2242
  %v2276 = vmul.f32 %v2275, 0.6931472
  %v2277 = vlog2.pop %v2244
  %v2278 = vmul.f32 %v2277, 0.6931472
  %v2279 = vlog2.pop %v2246
  %v2280 = vmul.f32 %v2279, 0.6931472
  %v2281 = vlog2.pop %v2248
  %v2282 = vmul.f32 %v2281, 0.6931472
  %v2283 = vlog2.pop %v2250
  %v2284 = vmul.f32 %v2283, 0.6931472
  %v2285 = vlog2.pop %v2252
  %v2286 = vmul.f32 %v2285, 0.6931472
  %v2287 = vlog2.pop %v2254
  %v2288 = vmul.f32 %v2287, 0.6931472
  %v2289 = vlog2.pop %v2256
  %v2290 = vmul.f32 %v2289, 0.6931472
  %v2291 = vlog2.pop %v2258
  %v2292 = vmul.f32 %v2291, 0.6931472
  %v2293 = vlog2.pop %v2260
  %v2294 = vmul.f32 %v2293, 0.6931472
  %v2295 = vlog2.pop %v2262
  %v2296 = vmul.f32 %v2295, 0.6931472
  %v2297 = vmul.f32 %v2264, 5.001221
  %v2298 = vmul.f32 %v2266, 5.001221
  %v2299 = vmul.f32 %v2268, 5.001221
  %v2300 = vmul.f32 %v2270, 5.001221
  %v2301 = vmul.f32 %v2272, 5.001221
  %v2302 = vmul.f32 %v2274, 5.001221
  %v2303 = vmul.f32 %v2276, 5.001221
  %v2304 = vmul.f32 %v2278, 5.001221
  %v2305 = vmul.f32 %v2280, 5.001221
  %v2306 = vmul.f32 %v2282, 5.001221
  %v2307 = vmul.f32 %v2284, 5.001221
  %v2308 = vmul.f32 %v2286, 5.001221
  %v2309 = vmul.f32 %v2288, 5.001221
  %v2310 = vmul.f32 %v2290, 5.001221
  %v2311 = vmul.f32 %v2292, 5.001221
  %v2312 = vmul.f32 %v2294, 5.001221
  %v2313 = vmul.f32 %v2296, 5.001221
  %v2314 = vtanh.pop %v2297
  %v2315 = vtanh.pop %v2298
  %v2316 = vtanh.pop %v2299
  %v2317 = vtanh.pop %v2300
  %v2318 = vtanh.pop %v2301
  %v2319 = vtanh.pop %v2302
  %v2320 = vtanh.pop %v2303
  %v2321 = vtanh.pop %v2304
  %v2322 = vtanh.pop %v2305
  %v2323 = vtanh.pop %v2306
  %v2324 = vtanh.pop %v2307
  %v2325 = vtanh.pop %v2308
  %v2326 = vtanh.pop %v2309
  %v2327 = vtanh.pop %v2310
  %v2328 = vtanh.pop %v2311
  %v2329 = vtanh.pop %v2312
  %v2330 = vtanh.pop %v2313
  %v2331 = vmul.f32 %v2314, 0.5
  %v2332 = vmul.f32 %v2315, 0.5
  %v2333 = vmul.f32 %v2316, 0.5
  %v2334 = vmul.f32 %v2317, 0.5
  %v2335 = vmul.f32 %v2318, 0.5
  %v2336 = vmul.f32 %v2319, 0.5
  %v2337 = vmul.f32 %v2320, 0.5
  %v2338 = vmul.f32 %v2321, 0.5
  %v2339 = vmul.f32 %v2322, 0.5
  %v2340 = vmul.f32 %v2323, 0.5
  %v2341 = vmul.f32 %v2324, 0.5
  %v2342 = vmul.f32 %v2325, 0.5
  %v2343 = vmul.f32 %v2326, 0.5
  %v2344 = vmul.f32 %v2327, 0.5
  %v2345 = vmul.f32 %v2328, 0.5
  %v2346 = vmul.f32 %v2329, 0.5
  %v2347 = vmul.f32 %v2330, 0.5
  %v2348 = vadd.f32 %v2331, 0.5
  %v2349 = vadd.f32 %v2332, 0.5
  %v2350 = vadd.f32 %v2333, 0.5
  %v2351 = vadd.f32 %v2334, 0.5
  %v2352 = vadd.f32 %v2335, 0.5
  %v2353 = vadd.f32 %v2336, 0.5
  %v2354 = vadd.f32 %v2337, 0.5
  %v2355 = vadd.f32 %v2338, 0.5
  %v2356 = vadd.f32 %v2339, 0.5
  %v2357 = vadd.f32 %v2340, 0.5
  %v2358 = vadd.f32 %v2341, 0.5
  %v2359 = vadd.f32 %v2342, 0.5
  %v2360 = vadd.f32 %v2343, 0.5
  %v2361 = vadd.f32 %v2344, 0.5
  %v2362 = vadd.f32 %v2345, 0.5
  %v2363 = vadd.f32 %v2346, 0.5
  %v2364 = vadd.f32 %v2347, 0.5
  %2365 = vst [vmem:[%s9] sm:$0xff] %v2348
  %2366 = vst [vmem:[%s9 + $0x8] sm:$0xff] %v2349
  %2367 = vst [vmem:[%s9 + $0x10] sm:$0xff] %v2350
  %2368 = vst [vmem:[%s9 + $0x18] sm:$0xff] %v2351
  %2369 = vst [vmem:[%s9 + $0x20] sm:$0xff] %v2352
  %2370 = vst [vmem:[%s9 + $0x28] sm:$0xff] %v2353
  %2371 = vst [vmem:[%s9 + $0x30] sm:$0xff] %v2354
  %2372 = vst [vmem:[%s9 + $0x38] sm:$0xff] %v2355
  %2373 = vst [vmem:[%s9 + $0x40] sm:$0xff] %v2356
  %2374 = vst [vmem:[%s9 + $0x48] sm:$0xff] %v2357
  %2375 = vst [vmem:[%s9 + $0x50] sm:$0xff] %v2358
  %2376 = vst [vmem:[%s9 + $0x58] sm:$0xff] %v2359
  %2377 = vst [vmem:[%s9 + $0x60] sm:$0xff] %v2360
  %2378 = vst [vmem:[%s9 + $0x68] sm:$0xff] %v2361
  %2379 = vst [vmem:[%s9 + $0x70] sm:$0xff] %v2362
  %2380 = vst [vmem:[%s9 + $0x78] sm:$0xff] %v2363
  %2381 = vst [vmem:[%s9 + $0x80] sm:$0xff] %v2364
  %v2382 = vlaneseq
  %v2383 = vand.u32 %v2382, 127
  %vm2384 = vcmp.eq.s32.totalorder %v2383, 0
  %vm2385 = vcmp.eq.s32.totalorder %v2383, 3
  %vm2386 = vcmp.lt.s32.totalorder %v2383, 3
  %2388 = vset.pattern.permute.xlu0 2
  %2389 = vperm.xlu0 %2388, %v1158
  %v2390 = vpop.permute.xlu0 %2389
  %2393 = vset.pattern.permute.xlu0 2
  %2394 = vperm.xlu0 %2393, %v1159
  %v2395 = vpop.permute.xlu0 %2394
  %2398 = vset.pattern.permute.xlu0 2
  %2399 = vperm.xlu0 %2398, %v1160
  %v2400 = vpop.permute.xlu0 %2399
  %2403 = vset.pattern.permute.xlu0 2
  %2404 = vperm.xlu0 %2403, %v1161
  %v2405 = vpop.permute.xlu0 %2404
  %2408 = vset.pattern.permute.xlu0 2
  %2409 = vperm.xlu0 %2408, %v1162
  %v2410 = vpop.permute.xlu0 %2409
  %2413 = vset.pattern.permute.xlu0 2
  %2414 = vperm.xlu0 %2413, %v1163
  %v2415 = vpop.permute.xlu0 %2414
  %2418 = vset.pattern.permute.xlu0 2
  %2419 = vperm.xlu0 %2418, %v1164
  %v2420 = vpop.permute.xlu0 %2419
  %2423 = vset.pattern.permute.xlu0 2
  %2424 = vperm.xlu0 %2423, %v1165
  %v2425 = vpop.permute.xlu0 %2424
  %2428 = vset.pattern.permute.xlu0 2
  %2429 = vperm.xlu0 %2428, %v1166
  %v2430 = vpop.permute.xlu0 %2429
  %2433 = vset.pattern.permute.xlu0 2
  %2434 = vperm.xlu0 %2433, %v1167
  %v2435 = vpop.permute.xlu0 %2434
  %2438 = vset.pattern.permute.xlu0 2
  %2439 = vperm.xlu0 %2438, %v1168
  %v2440 = vpop.permute.xlu0 %2439
  %2443 = vset.pattern.permute.xlu0 2
  %2444 = vperm.xlu0 %2443, %v1169
  %v2445 = vpop.permute.xlu0 %2444
  %2448 = vset.pattern.permute.xlu0 2
  %2449 = vperm.xlu0 %2448, %v1170
  %v2450 = vpop.permute.xlu0 %2449
  %2453 = vset.pattern.permute.xlu0 2
  %2454 = vperm.xlu0 %2453, %v1171
  %v2455 = vpop.permute.xlu0 %2454
  %2458 = vset.pattern.permute.xlu0 2
  %2459 = vperm.xlu0 %2458, %v1172
  %v2460 = vpop.permute.xlu0 %2459
  %2463 = vset.pattern.permute.xlu0 2
  %2464 = vperm.xlu0 %2463, %v1173
  %v2465 = vpop.permute.xlu0 %2464
  %2468 = vset.pattern.permute.xlu0 2
  %2469 = vperm.xlu0 %2468, %v1174
  %v2470 = vpop.permute.xlu0 %2469
  %v2472 = vsel %vm2386, %v2390, 0.0
  %v2473 = vsel %vm2386, %v2395, 0.0
  %v2474 = vsel %vm2386, %v2400, 0.0
  %v2475 = vsel %vm2386, %v2405, 0.0
  %v2476 = vsel %vm2386, %v2410, 0.0
  %v2477 = vsel %vm2386, %v2415, 0.0
  %v2478 = vsel %vm2386, %v2420, 0.0
  %v2479 = vsel %vm2386, %v2425, 0.0
  %v2480 = vsel %vm2386, %v2430, 0.0
  %v2481 = vsel %vm2386, %v2435, 0.0
  %v2482 = vsel %vm2386, %v2440, 0.0
  %v2483 = vsel %vm2386, %v2445, 0.0
  %v2484 = vsel %vm2386, %v2450, 0.0
  %v2485 = vsel %vm2386, %v2455, 0.0
  %v2486 = vsel %vm2386, %v2460, 0.0
  %v2487 = vsel %vm2386, %v2465, 0.0
  %v2488 = vsel %vm2386, %v2470, 0.0
  %2489 = vset.pattern.permute.xlu0 1
  %2490 = vperm.xlu0 %2489, %v1005
  %v2491 = vpop.permute.xlu0 %2490
  %2493 = vset.pattern.permute.xlu0 1
  %2494 = vperm.xlu0 %2493, %v1006
  %v2495 = vpop.permute.xlu0 %2494
  %2497 = vset.pattern.permute.xlu0 1
  %2498 = vperm.xlu0 %2497, %v1007
  %v2499 = vpop.permute.xlu0 %2498
  %2501 = vset.pattern.permute.xlu0 1
  %2502 = vperm.xlu0 %2501, %v1008
  %v2503 = vpop.permute.xlu0 %2502
  %2505 = vset.pattern.permute.xlu0 1
  %2506 = vperm.xlu0 %2505, %v1009
  %v2507 = vpop.permute.xlu0 %2506
  %2509 = vset.pattern.permute.xlu0 1
  %2510 = vperm.xlu0 %2509, %v1010
  %v2511 = vpop.permute.xlu0 %2510
  %2513 = vset.pattern.permute.xlu0 1
  %2514 = vperm.xlu0 %2513, %v1011
  %v2515 = vpop.permute.xlu0 %2514
  %2517 = vset.pattern.permute.xlu0 1
  %2518 = vperm.xlu0 %2517, %v1012
  %v2519 = vpop.permute.xlu0 %2518
  %2521 = vset.pattern.permute.xlu0 1
  %2522 = vperm.xlu0 %2521, %v1013
  %v2523 = vpop.permute.xlu0 %2522
  %2525 = vset.pattern.permute.xlu0 1
  %2526 = vperm.xlu0 %2525, %v1014
  %v2527 = vpop.permute.xlu0 %2526
  %2529 = vset.pattern.permute.xlu0 1
  %2530 = vperm.xlu0 %2529, %v1015
  %v2531 = vpop.permute.xlu0 %2530
  %2533 = vset.pattern.permute.xlu0 1
  %2534 = vperm.xlu0 %2533, %v1016
  %v2535 = vpop.permute.xlu0 %2534
  %2537 = vset.pattern.permute.xlu0 1
  %2538 = vperm.xlu0 %2537, %v1017
  %v2539 = vpop.permute.xlu0 %2538
  %2541 = vset.pattern.permute.xlu0 1
  %2542 = vperm.xlu0 %2541, %v1018
  %v2543 = vpop.permute.xlu0 %2542
  %2545 = vset.pattern.permute.xlu0 1
  %2546 = vperm.xlu0 %2545, %v1019
  %v2547 = vpop.permute.xlu0 %2546
  %2549 = vset.pattern.permute.xlu0 1
  %2550 = vperm.xlu0 %2549, %v1020
  %v2551 = vpop.permute.xlu0 %2550
  %2553 = vset.pattern.permute.xlu0 1
  %2554 = vperm.xlu0 %2553, %v1021
  %v2555 = vpop.permute.xlu0 %2554
  %v2557 = vsel %vm2385, %v2491, %v2472
  %v2558 = vsel %vm2385, %v2495, %v2473
  %v2559 = vsel %vm2385, %v2499, %v2474
  %v2560 = vsel %vm2385, %v2503, %v2475
  %v2561 = vsel %vm2385, %v2507, %v2476
  %v2562 = vsel %vm2385, %v2511, %v2477
  %v2563 = vsel %vm2385, %v2515, %v2478
  %v2564 = vsel %vm2385, %v2519, %v2479
  %v2565 = vsel %vm2385, %v2523, %v2480
  %v2566 = vsel %vm2385, %v2527, %v2481
  %v2567 = vsel %vm2385, %v2531, %v2482
  %v2568 = vsel %vm2385, %v2535, %v2483
  %v2569 = vsel %vm2385, %v2539, %v2484
  %v2570 = vsel %vm2385, %v2543, %v2485
  %v2571 = vsel %vm2385, %v2547, %v2486
  %v2572 = vsel %vm2385, %v2551, %v2487
  %v2573 = vsel %vm2385, %v2555, %v2488
  %2574 = vset.pattern.permute.xlu0 0
  %2575 = vperm.xlu0 %2574, %v1005
  %v2576 = vpop.permute.xlu0 %2575
  %2578 = vset.pattern.permute.xlu0 0
  %2579 = vperm.xlu0 %2578, %v1006
  %v2580 = vpop.permute.xlu0 %2579
  %2582 = vset.pattern.permute.xlu0 0
  %2583 = vperm.xlu0 %2582, %v1007
  %v2584 = vpop.permute.xlu0 %2583
  %2586 = vset.pattern.permute.xlu0 0
  %2587 = vperm.xlu0 %2586, %v1008
  %v2588 = vpop.permute.xlu0 %2587
  %2590 = vset.pattern.permute.xlu0 0
  %2591 = vperm.xlu0 %2590, %v1009
  %v2592 = vpop.permute.xlu0 %2591
  %2594 = vset.pattern.permute.xlu0 0
  %2595 = vperm.xlu0 %2594, %v1010
  %v2596 = vpop.permute.xlu0 %2595
  %2598 = vset.pattern.permute.xlu0 0
  %2599 = vperm.xlu0 %2598, %v1011
  %v2600 = vpop.permute.xlu0 %2599
  %2602 = vset.pattern.permute.xlu0 0
  %2603 = vperm.xlu0 %2602, %v1012
  %v2604 = vpop.permute.xlu0 %2603
  %2606 = vset.pattern.permute.xlu0 0
  %2607 = vperm.xlu0 %2606, %v1013
  %v2608 = vpop.permute.xlu0 %2607
  %2610 = vset.pattern.permute.xlu0 0
  %2611 = vperm.xlu0 %2610, %v1014
  %v2612 = vpop.permute.xlu0 %2611
  %2614 = vset.pattern.permute.xlu0 0
  %2615 = vperm.xlu0 %2614, %v1015
  %v2616 = vpop.permute.xlu0 %2615
  %2618 = vset.pattern.permute.xlu0 0
  %2619 = vperm.xlu0 %2618, %v1016
  %v2620 = vpop.permute.xlu0 %2619
  %2622 = vset.pattern.permute.xlu0 0
  %2623 = vperm.xlu0 %2622, %v1017
  %v2624 = vpop.permute.xlu0 %2623
  %2626 = vset.pattern.permute.xlu0 0
  %2627 = vperm.xlu0 %2626, %v1018
  %v2628 = vpop.permute.xlu0 %2627
  %2630 = vset.pattern.permute.xlu0 0
  %2631 = vperm.xlu0 %2630, %v1019
  %v2632 = vpop.permute.xlu0 %2631
  %2634 = vset.pattern.permute.xlu0 0
  %2635 = vperm.xlu0 %2634, %v1020
  %v2636 = vpop.permute.xlu0 %2635
  %2638 = vset.pattern.permute.xlu0 0
  %2639 = vperm.xlu0 %2638, %v1021
  %v2640 = vpop.permute.xlu0 %2639
  %v2642 = vsel %vm2384, %v2576, %v2557
  %v2643 = vsel %vm2384, %v2580, %v2558
  %v2644 = vsel %vm2384, %v2584, %v2559
  %v2645 = vsel %vm2384, %v2588, %v2560
  %v2646 = vsel %vm2384, %v2592, %v2561
  %v2647 = vsel %vm2384, %v2596, %v2562
  %v2648 = vsel %vm2384, %v2600, %v2563
  %v2649 = vsel %vm2384, %v2604, %v2564
  %v2650 = vsel %vm2384, %v2608, %v2565
  %v2651 = vsel %vm2384, %v2612, %v2566
  %v2652 = vsel %vm2384, %v2616, %v2567
  %v2653 = vsel %vm2384, %v2620, %v2568
  %v2654 = vsel %vm2384, %v2624, %v2569
  %v2655 = vsel %vm2384, %v2628, %v2570
  %v2656 = vsel %vm2384, %v2632, %v2571
  %v2657 = vsel %vm2384, %v2636, %v2572
  %v2658 = vsel %vm2384, %v2640, %v2573
  %2659 = vst.msk [vmem:[%s10] sm:$0xff] %vm59, %v2642
  %2660 = vst.msk [vmem:[%s10 + $0x8] sm:$0xff] %vm59, %v2643
  %2661 = vst.msk [vmem:[%s10 + $0x10] sm:$0xff] %vm59, %v2644
  %2662 = vst.msk [vmem:[%s10 + $0x18] sm:$0xff] %vm59, %v2645
  %2663 = vst.msk [vmem:[%s10 + $0x20] sm:$0xff] %vm59, %v2646
  %2664 = vst.msk [vmem:[%s10 + $0x28] sm:$0xff] %vm59, %v2647
  %2665 = vst.msk [vmem:[%s10 + $0x30] sm:$0xff] %vm59, %v2648
  %2666 = vst.msk [vmem:[%s10 + $0x38] sm:$0xff] %vm59, %v2649
  %2667 = vst.msk [vmem:[%s10 + $0x40] sm:$0xff] %vm59, %v2650
  %2668 = vst.msk [vmem:[%s10 + $0x48] sm:$0xff] %vm59, %v2651
  %2669 = vst.msk [vmem:[%s10 + $0x50] sm:$0xff] %vm59, %v2652
  %2670 = vst.msk [vmem:[%s10 + $0x58] sm:$0xff] %vm59, %v2653
  %2671 = vst.msk [vmem:[%s10 + $0x60] sm:$0xff] %vm59, %v2654
  %2672 = vst.msk [vmem:[%s10 + $0x68] sm:$0xff] %vm59, %v2655
  %2673 = vst.msk [vmem:[%s10 + $0x70] sm:$0xff] %vm59, %v2656
  %2674 = vst.msk [vmem:[%s10 + $0x78] sm:$0xff] %vm59, %v2657
  %2675 = vst.msk [vmem:[%s10 + $0x80] sm:$0xff] %vm59, %v2658
  // Predicated region
  $region38: #{gaussian_kernel_forward.1} parent=0 // pred_check
    _
  $region39: #{gaussian_kernel_forward.1} parent=0 // pred_check_branch
    %2677 = sbr.rel (0) target = $region41
  $region40: #{gaussian_kernel_forward.1} parent=0 // pred_region
    _
  $region41: #{gaussian_kernel_forward.1} parent=0 // pred_fallthru
    _
  // Predicated region
  $region42: #{gaussian_kernel_forward.1} parent=0 // pred_check
    _
  $region43: #{gaussian_kernel_forward.1} parent=0 // pred_check_branch
    %2679 = sbr.rel (0) target = $region45
  $region44: #{gaussian_kernel_forward.1} parent=0 // pred_region
    _
  $region45: #{gaussian_kernel_forward.1} parent=0 // pred_fallthru
    _
  // Predicated region
  $region46: #{gaussian_kernel_forward.1} parent=0 // pred_check
    _
  $region47: #{gaussian_kernel_forward.1} parent=0 // pred_check_branch
    %2681 = sbr.rel (0) target = $region49
  $region48: #{gaussian_kernel_forward.1} parent=0 // pred_region
    _
  $region49: #{gaussian_kernel_forward.1} parent=0 // pred_fallthru
    _
  // Predicated region
  $region50: #{gaussian_kernel_forward.1} parent=0 // pred_check
    _
  $region51: #{gaussian_kernel_forward.1} parent=0 // pred_check_branch
    %2683 = sbr.rel (0) target = $region53
  $region52: #{gaussian_kernel_forward.1} parent=0 // pred_region
    _
  $region53: #{gaussian_kernel_forward.1} parent=0 // pred_fallthru
    _

</llo_original>
